<compile_context>
chip_gen: v7x
topology: tpu7x:2x2x1
jax: 0.10.0
libtpu: 0.0.40
codegen_flags: <defaults>
</compile_context>

<pallas_src>
import jax
import jax.numpy as jnp
from jax.experimental import pallas as pl
from jax.experimental.pallas import tpu as pltpu

_LANES = 128
_MAX_BATCH_TILE = 1024          # safe under v5e's 16 MiB scoped-VMEM default
_MIN_SPLIT = 256                # above this, force >= 2 grid steps (v7x megacore)
_VMEM_LIMIT = 32 * 1024 * 1024  # headroom on v5e/v6e/v7x


def _round_up(n, m):
    return (n + m - 1) // m * m


def _pad2d(a, rows, cols):
    r, c = a.shape
    return jnp.pad(a, ((0, rows - r), (0, cols - c)))


def _choose_batch_tile(B):
    """8-aligned batch tile; >= 2 grid steps for larger batches (v7x megacore)."""
    b8 = _round_up(B, 8)
    if b8 <= _MIN_SPLIT:
        return b8                        # single grid step for small batches
    half = _round_up((b8 + 1) // 2, 8)   # at least 2 steps
    return min(_MAX_BATCH_TILE, half)


def _compiler_params():
    return pltpu.CompilerParams(
        dimension_semantics=("parallel",),
        vmem_limit_bytes=_VMEM_LIMIT,
    )


# ---------------------------------------------------------------------------
# Parameter init (mimics nn.Linear default: uniform +-1/sqrt(in)).
# Weights stored pre-transposed (in, out), zero-padded to (D, D), stacked per
# head as (L, D, D) bf16.  Biases stacked as (L, 1, D) f32.
# ---------------------------------------------------------------------------
def _init_mlp_stacked(key, dims, D):
    n = len(dims) - 1
    keys = jax.random.split(key, n)
    w_list, b_list = [], []
    for k, din, dout in zip(keys, dims[:-1], dims[1:]):
        kw, kb = jax.random.split(k)
        bound = 1.0 / (float(din) ** 0.5)
        w = jax.random.uniform(kw, (din, dout), jnp.float32, -bound, bound)
        b = jax.random.uniform(kb, (1, dout), jnp.float32, -bound, bound)
        w_list.append(_pad2d(w, D, D))
        b_list.append(_pad2d(b, 1, D))
    w_stack = jnp.stack(w_list).astype(jnp.bfloat16)   # (L, D, D) bf16
    b_stack = jnp.stack(b_list)                        # (L, 1, D) f32
    return w_stack, b_stack


# ---------------------------------------------------------------------------
# Shared in-kernel MLP helper: stacked weights, bf16 operands, f32 accumulate.
# Bias add / ReLU / sigmoid stay f32 (works on v5e which has no bf16 VPU).
# ---------------------------------------------------------------------------
def _mlp_compute(h, w_ref, b_ref, n_layers, sigmoid_out):
    for i in range(n_layers):
        h = jnp.dot(h.astype(jnp.bfloat16), w_ref[i],
                    preferred_element_type=jnp.float32)
        h = h + b_ref[i]
        if i < n_layers - 1:
            h = jnp.maximum(h, 0.0)          # ReLU
    if sigmoid_out:
        h = jax.nn.sigmoid(h)
    return h


# ---------------------------------------------------------------------------
# Single-head MLP kernel (used by gen / enc / disc1 individually).
# ---------------------------------------------------------------------------
def mlp_forward(x, w_stack, b_stack, sigmoid_out, out_dim):
    B = x.shape[0]
    L, D, _ = w_stack.shape
    tile = _choose_batch_tile(B)
    B_pad = _round_up(B, tile)
    xp = _pad2d(x, B_pad, D)

    def kernel(x_ref, w_ref, b_ref, o_ref):
        o_ref[...] = _mlp_compute(x_ref[...], w_ref, b_ref, L, sigmoid_out)

    out = pl.pallas_call(
        kernel,
        out_shape=jax.ShapeDtypeStruct((B_pad, D), jnp.float32),
        grid_spec=pltpu.PrefetchScalarGridSpec(
            num_scalar_prefetch=0,
            grid=(B_pad // tile,),
            in_specs=[pl.BlockSpec((tile, D), lambda i: (i, 0)),
                      pl.BlockSpec((L, D, D), lambda i: (0, 0, 0)),
                      pl.BlockSpec((L, 1, D), lambda i: (0, 0, 0))],
            out_specs=pl.BlockSpec((tile, D), lambda i: (i, 0)),
        ),
        compiler_params=_compiler_params(),
    )(xp, w_stack, b_stack)
    return out[:B, :out_dim]


# ---------------------------------------------------------------------------
# Fully fused MRGAN forward: one pallas_call, weights shared via batch-concat.
# ---------------------------------------------------------------------------
def _make_fused_kernel(n_g, n_e, n_d, tile):
    def kernel(x_ref, z_ref, gw, gb, ew, eb, dw, db,
               zrec_ref, gen_ref, disc_ref, cat_ref):
        x = x_ref[...]
        z = z_ref[...]

        # ---- enc(x) --------------------------------------------------
        z_rec = _mlp_compute(x, ew, eb, n_e, False)
        zrec_ref[...] = z_rec

        # ---- gen on batch-concat([z ; z_rec]) : weights pushed once --
        cat_ref[0:tile, :] = z
        cat_ref[tile:2 * tile, :] = z_rec
        gen_pair = _mlp_compute(cat_ref[...], gw, gb, n_g, True)
        x_gen = gen_pair[0:tile, :]
        gen_ref[0, :, :] = x_gen                      # gen(z)
        gen_ref[1, :, :] = gen_pair[tile:2 * tile, :]  # gen(enc(x))

        # ---- disc1 on batch-concat([x ; x_gen]) : weights pushed once
        cat_ref[0:tile, :] = x
        cat_ref[tile:2 * tile, :] = x_gen
        disc_pair = _mlp_compute(cat_ref[...], dw, db, n_d, True)
        disc_ref[0, :, :] = disc_pair[0:tile, :]       # disc1(x)
        disc_ref[1, :, :] = disc_pair[tile:2 * tile, :]  # disc1(gen(z))

    return kernel


def mrgan_fused_forward(x, z, gen_wb, enc_wb, disc_wb, xdim, zdim):
    g_w, g_b = gen_wb
    e_w, e_b = enc_wb
    d_w, d_b = disc_wb
    n_g, D, _ = g_w.shape
    n_e = e_w.shape[0]
    n_d = d_w.shape[0]

    B = x.shape[0]
    tile = _choose_batch_tile(B)
    B_pad = _round_up(B, tile)
    xp = _pad2d(x, B_pad, D)
    zp = _pad2d(z, B_pad, D)

    kernel = _make_fused_kernel(n_g, n_e, n_d, tile)

    def full(shape):
        return pl.BlockSpec(shape, lambda i: (0,) * len(shape))

    in_specs = [
        pl.BlockSpec((tile, D), lambda i: (i, 0)),   # x tile
        pl.BlockSpec((tile, D), lambda i: (i, 0)),   # z tile
        full((n_g, D, D)), full((n_g, 1, D)),
        full((n_e, D, D)), full((n_e, 1, D)),
        full((n_d, D, D)), full((n_d, 1, D)),
    ]
    out_shape = (
        jax.ShapeDtypeStruct((B_pad, D), jnp.float32),     # z_rec
        jax.ShapeDtypeStruct((2, B_pad, D), jnp.float32),  # [x_gen, x_rec]
        jax.ShapeDtypeStruct((2, B_pad, D), jnp.float32),  # [d_real, d_fake]
    )
    out_specs = (
        pl.BlockSpec((tile, D), lambda i: (i, 0)),
        pl.BlockSpec((2, tile, D), lambda i: (0, i, 0)),
        pl.BlockSpec((2, tile, D), lambda i: (0, i, 0)),
    )

    zrec, gen_pair, disc_pair = pl.pallas_call(
        kernel,
        out_shape=out_shape,
        grid_spec=pltpu.PrefetchScalarGridSpec(
            num_scalar_prefetch=0,
            grid=(B_pad // tile,),
            in_specs=in_specs,
            out_specs=out_specs,
            scratch_shapes=[pltpu.VMEM((2 * tile, D), jnp.float32)],
        ),
        compiler_params=_compiler_params(),
    )(xp, zp, g_w, g_b, e_w, e_b, d_w, d_b)

    x_gen = gen_pair[0, :B, :xdim]
    x_rec = gen_pair[1, :B, :xdim]
    z_rec = zrec[:B, :zdim]
    d_real = disc_pair[0, :B, :1]
    d_fake = disc_pair[1, :B, :1]
    return x_gen, z_rec, x_rec, d_real, d_fake


# ---------------------------------------------------------------------------
# Model wrapper.
# ---------------------------------------------------------------------------
class MRGANPallas:
    def __init__(self, xdim, zdim, gdims, ddims, edims, key):
        self.xdim, self.zdim = xdim, zdim
        self.g_dims = [zdim] + list(gdims) + [xdim]
        self.e_dims = [xdim] + list(edims) + [zdim]
        self.d_dims = [xdim] + list(ddims) + [1]
        self.D = _round_up(max(self.g_dims + self.e_dims + self.d_dims), _LANES)
        kg, ke, kd = jax.random.split(key, 3)
        self.g_w, self.g_b = _init_mlp_stacked(kg, self.g_dims, self.D)
        self.e_w, self.e_b = _init_mlp_stacked(ke, self.e_dims, self.D)
        self.d_w, self.d_b = _init_mlp_stacked(kd, self.d_dims, self.D)

    def gen(self, z):
        return mlp_forward(z, self.g_w, self.g_b, True, self.xdim)

    def enc(self, x):
        return mlp_forward(x, self.e_w, self.e_b, False, self.zdim)

    def disc1(self, x):
        return mlp_forward(x, self.d_w, self.d_b, True, 1)

    def forward(self, x, z):
        return mrgan_fused_forward(
            x, z, (self.g_w, self.g_b), (self.e_w, self.e_b),
            (self.d_w, self.d_b), self.xdim, self.zdim)


# ---------------------------------------------------------------------------
# Pure-JAX reference of the same padded/bf16 math for correctness checking.
# ---------------------------------------------------------------------------
def _ref_mlp(h, w_stack, b_stack, sigmoid_out):
    n = w_stack.shape[0]
    for i in range(n):
        h = jnp.dot(h.astype(jnp.bfloat16), w_stack[i],
                    preferred_element_type=jnp.float32) + b_stack[i]
        if i < n - 1:
            h = jnp.maximum(h, 0.0)
    return jax.nn.sigmoid(h) if sigmoid_out else h


def _ref_forward(m, x, z):
    B = x.shape[0]
    xp = _pad2d(x, B, m.D)
    zp = _pad2d(z, B, m.D)
    x_gen = _ref_mlp(zp, m.g_w, m.g_b, True)
    z_rec = _ref_mlp(xp, m.e_w, m.e_b, False)
    x_rec = _ref_mlp(z_rec, m.g_w, m.g_b, True)
    d_real = _ref_mlp(xp, m.d_w, m.d_b, True)
    d_fake = _ref_mlp(x_gen, m.d_w, m.d_b, True)
    return (x_gen[:, :m.xdim], z_rec[:, :m.zdim], x_rec[:, :m.xdim],
            d_real[:, :1], d_fake[:, :1])


if __name__ == "__main__":
    xdim, zdim = 32, 8
    gdims, ddims, edims = [32, 32], [32, 32], [32, 32]
    B = 16

    key = jax.random.PRNGKey(0)
    k_model, k_x, k_z = jax.random.split(key, 3)

    model = MRGANPallas(xdim, zdim, gdims, ddims, edims, k_model)

    x = jax.random.uniform(k_x, (B, xdim), jnp.float32)   # data-like (sigmoid range)
    z = jax.random.normal(k_z, (B, zdim), jnp.float32)    # latent

    outs = jax.block_until_ready(model.forward(x, z))
    x_gen, z_rec, x_rec, d_real, d_fake = outs

    # Shape / range sanity.
    assert x_gen.shape == (B, xdim)
    assert z_rec.shape == (B, zdim)
    assert x_rec.shape == (B, xdim)
    assert d_real.shape == (B, 1) and d_fake.shape == (B, 1)
    assert bool(jnp.all(jnp.isfinite(x_gen)))
    assert bool(jnp.all((d_real >= 0) & (d_real <= 1)))
    assert bool(jnp.all((d_fake >= 0) & (d_fake <= 1)))

    # Numerical check vs pure-JAX reference of the same bf16/padded math
    # (bf16 operands -> loosened tolerance vs the old f32 1e-5 check).
    ref = _ref_forward(model, x, z)
    for got, want in zip(outs, ref):
        assert got.shape == want.shape
        assert bool(jnp.allclose(got, want, rtol=2e-2, atol=2e-2)), \
            float(jnp.max(jnp.abs(got - want)))

    # Standalone single-head kernels agree with the fused kernel.
    assert bool(jnp.allclose(model.gen(z), x_gen, rtol=1e-3, atol=1e-3))
    assert bool(jnp.allclose(model.enc(x), z_rec, rtol=1e-3, atol=1e-3))
    assert bool(jnp.allclose(model.disc1(x), d_real, rtol=1e-3, atol=1e-3))

    print("KERNEL_OK")
</pallas_src>

<mosaic_0001>
module attributes {stable_mosaic.version = 11 : i64} {
  func.func @kernel(%arg0: i32, %arg1: memref<16x128xf32, #tpu.memory_space<vmem>>, %arg2: memref<16x128xf32, #tpu.memory_space<vmem>>, %arg3: memref<3x128x128xbf16, #tpu.memory_space<vmem>>, %arg4: memref<3x1x128xf32, #tpu.memory_space<vmem>>, %arg5: memref<3x128x128xbf16, #tpu.memory_space<vmem>>, %arg6: memref<3x1x128xf32, #tpu.memory_space<vmem>>, %arg7: memref<3x128x128xbf16, #tpu.memory_space<vmem>>, %arg8: memref<3x1x128xf32, #tpu.memory_space<vmem>>, %arg9: memref<16x128xf32, #tpu.memory_space<vmem>>, %arg10: memref<2x16x128xf32, #tpu.memory_space<vmem>>, %arg11: memref<2x16x128xf32, #tpu.memory_space<vmem>>, %arg12: memref<32x128xf32, #tpu.memory_space<vmem>>) attributes {dimension_semantics = [#tpu.dimension_semantics<parallel>], iteration_bounds = array<i64: 1>, scalar_prefetch = 0 : i64, scratch_operands = 1 : i64, tpu.core_type = #tpu.core_type<tc>, window_params = [{transform_indices = @transform_0, window_bounds = array<i64: 16, 128>}, {transform_indices = @transform_1, window_bounds = array<i64: 16, 128>}, {pipeline_mode = #tpu.pipeline_mode<synchronous>, transform_indices = @transform_2, window_bounds = array<i64: 3, 128, 128>}, {pipeline_mode = #tpu.pipeline_mode<synchronous>, transform_indices = @transform_3, window_bounds = array<i64: 3, 1, 128>}, {pipeline_mode = #tpu.pipeline_mode<synchronous>, transform_indices = @transform_4, window_bounds = array<i64: 3, 128, 128>}, {pipeline_mode = #tpu.pipeline_mode<synchronous>, transform_indices = @transform_5, window_bounds = array<i64: 3, 1, 128>}, {pipeline_mode = #tpu.pipeline_mode<synchronous>, transform_indices = @transform_6, window_bounds = array<i64: 3, 128, 128>}, {pipeline_mode = #tpu.pipeline_mode<synchronous>, transform_indices = @transform_7, window_bounds = array<i64: 3, 1, 128>}, {transform_indices = @transform_8, window_bounds = array<i64: 16, 128>}, {transform_indices = @transform_9, window_bounds = array<i64: 2, 16, 128>}, {transform_indices = @transform_10, window_bounds = array<i64: 2, 16, 128>}]} {
    %c0 = arith.constant 0 : index
    %c0_0 = arith.constant 0 : index
    %0 = vector.load %arg1[%c0, %c0_0] : memref<16x128xf32, #tpu.memory_space<vmem>>, vector<16x128xf32>
    %c0_1 = arith.constant 0 : index
    %c0_2 = arith.constant 0 : index
    %1 = vector.load %arg2[%c0_1, %c0_2] : memref<16x128xf32, #tpu.memory_space<vmem>>, vector<16x128xf32>
    %2 = arith.truncf %0 : vector<16x128xf32> to vector<16x128xbf16>
    %c0_3 = arith.constant 0 : index
    %c0_4 = arith.constant 0 : index
    %c0_5 = arith.constant 0 : index
    %3 = vector.load %arg5[%c0_3, %c0_4, %c0_5] : memref<3x128x128xbf16, #tpu.memory_space<vmem>>, vector<1x128x128xbf16>
    %4 = vector.shape_cast %3 : vector<1x128x128xbf16> to vector<128x128xbf16>
    %cst = arith.constant dense<0.000000e+00> : vector<16x128xf32>
    %5 = tpu.matmul %2, %4, %cst {dimension_numbers = #tpu.dot_dimension_numbers<[1], [0], [0], [1], [0, 0, 1, 1], [], []>} : vector<16x128xbf16>, vector<128x128xbf16>, vector<16x128xf32> -> vector<16x128xf32>
    %c0_6 = arith.constant 0 : index
    %c0_7 = arith.constant 0 : index
    %c0_8 = arith.constant 0 : index
    %6 = vector.load %arg6[%c0_6, %c0_7, %c0_8] : memref<3x1x128xf32, #tpu.memory_space<vmem>>, vector<1x1x128xf32>
    %7 = vector.shape_cast %6 : vector<1x1x128xf32> to vector<1x128xf32>
    %8 = vector.broadcast %7 : vector<1x128xf32> to vector<16x128xf32>
    %9 = arith.addf %5, %8 : vector<16x128xf32>
    %cst_9 = arith.constant 0.000000e+00 : f32
    %10 = vector.broadcast %cst_9 : f32 to vector<16x128xf32>
    %11 = arith.maximumf %9, %10 : vector<16x128xf32>
    %12 = arith.truncf %11 : vector<16x128xf32> to vector<16x128xbf16>
    %c1 = arith.constant 1 : index
    %c0_10 = arith.constant 0 : index
    %c0_11 = arith.constant 0 : index
    %13 = vector.load %arg5[%c1, %c0_10, %c0_11] : memref<3x128x128xbf16, #tpu.memory_space<vmem>>, vector<1x128x128xbf16>
    %14 = vector.shape_cast %13 : vector<1x128x128xbf16> to vector<128x128xbf16>
    %cst_12 = arith.constant dense<0.000000e+00> : vector<16x128xf32>
    %15 = tpu.matmul %12, %14, %cst_12 {dimension_numbers = #tpu.dot_dimension_numbers<[1], [0], [0], [1], [0, 0, 1, 1], [], []>} : vector<16x128xbf16>, vector<128x128xbf16>, vector<16x128xf32> -> vector<16x128xf32>
    %c1_13 = arith.constant 1 : index
    %c0_14 = arith.constant 0 : index
    %c0_15 = arith.constant 0 : index
    %16 = vector.load %arg6[%c1_13, %c0_14, %c0_15] : memref<3x1x128xf32, #tpu.memory_space<vmem>>, vector<1x1x128xf32>
    %17 = vector.shape_cast %16 : vector<1x1x128xf32> to vector<1x128xf32>
    %18 = vector.broadcast %17 : vector<1x128xf32> to vector<16x128xf32>
    %19 = arith.addf %15, %18 : vector<16x128xf32>
    %cst_16 = arith.constant 0.000000e+00 : f32
    %20 = vector.broadcast %cst_16 : f32 to vector<16x128xf32>
    %21 = arith.maximumf %19, %20 : vector<16x128xf32>
    %22 = arith.truncf %21 : vector<16x128xf32> to vector<16x128xbf16>
    %c2 = arith.constant 2 : index
    %c0_17 = arith.constant 0 : index
    %c0_18 = arith.constant 0 : index
    %23 = vector.load %arg5[%c2, %c0_17, %c0_18] : memref<3x128x128xbf16, #tpu.memory_space<vmem>>, vector<1x128x128xbf16>
    %24 = vector.shape_cast %23 : vector<1x128x128xbf16> to vector<128x128xbf16>
    %cst_19 = arith.constant dense<0.000000e+00> : vector<16x128xf32>
    %25 = tpu.matmul %22, %24, %cst_19 {dimension_numbers = #tpu.dot_dimension_numbers<[1], [0], [0], [1], [0, 0, 1, 1], [], []>} : vector<16x128xbf16>, vector<128x128xbf16>, vector<16x128xf32> -> vector<16x128xf32>
    %c2_20 = arith.constant 2 : index
    %c0_21 = arith.constant 0 : index
    %c0_22 = arith.constant 0 : index
    %26 = vector.load %arg6[%c2_20, %c0_21, %c0_22] : memref<3x1x128xf32, #tpu.memory_space<vmem>>, vector<1x1x128xf32>
    %27 = vector.shape_cast %26 : vector<1x1x128xf32> to vector<1x128xf32>
    %28 = vector.broadcast %27 : vector<1x128xf32> to vector<16x128xf32>
    %29 = arith.addf %25, %28 : vector<16x128xf32>
    %c0_23 = arith.constant 0 : index
    %c0_24 = arith.constant 0 : index
    %30 = vector.load %arg9[%c0_23, %c0_24] : memref<16x128xf32, #tpu.memory_space<vmem>>, vector<16x128xf32>
    tpu.vector_store %arg9[%c0_23, %c0_24], %29 {strides = array<i32>} : memref<16x128xf32, #tpu.memory_space<vmem>>, vector<16x128xf32>,
    %c0_25 = arith.constant 0 : index
    %c0_26 = arith.constant 0 : index
    %31 = vector.load %arg12[%c0_25, %c0_26] : memref<32x128xf32, #tpu.memory_space<vmem>>, vector<16x128xf32>
    tpu.vector_store %arg12[%c0_25, %c0_26], %1 {strides = array<i32>} : memref<32x128xf32, #tpu.memory_space<vmem>>, vector<16x128xf32>,
    %c16 = arith.constant 16 : index
    %c0_27 = arith.constant 0 : index
    %32 = vector.load %arg12[%c16, %c0_27] : memref<32x128xf32, #tpu.memory_space<vmem>>, vector<16x128xf32>
    tpu.vector_store %arg12[%c16, %c0_27], %29 {strides = array<i32>} : memref<32x128xf32, #tpu.memory_space<vmem>>, vector<16x128xf32>,
    %c0_28 = arith.constant 0 : index
    %c0_29 = arith.constant 0 : index
    %33 = vector.load %arg12[%c0_28, %c0_29] : memref<32x128xf32, #tpu.memory_space<vmem>>, vector<32x128xf32>
    %34 = arith.truncf %33 : vector<32x128xf32> to vector<32x128xbf16>
    %c0_30 = arith.constant 0 : index
    %c0_31 = arith.constant 0 : index
    %c0_32 = arith.constant 0 : index
    %35 = vector.load %arg3[%c0_30, %c0_31, %c0_32] : memref<3x128x128xbf16, #tpu.memory_space<vmem>>, vector<1x128x128xbf16>
    %36 = vector.shape_cast %35 : vector<1x128x128xbf16> to vector<128x128xbf16>
    %cst_33 = arith.constant dense<0.000000e+00> : vector<32x128xf32>
    %37 = tpu.matmul %34, %36, %cst_33 {dimension_numbers = #tpu.dot_dimension_numbers<[1], [0], [0], [1], [0, 0, 1, 1], [], []>} : vector<32x128xbf16>, vector<128x128xbf16>, vector<32x128xf32> -> vector<32x128xf32>
    %c0_34 = arith.constant 0 : index
    %c0_35 = arith.constant 0 : index
    %c0_36 = arith.constant 0 : index
    %38 = vector.load %arg4[%c0_34, %c0_35, %c0_36] : memref<3x1x128xf32, #tpu.memory_space<vmem>>, vector<1x1x128xf32>
    %39 = vector.shape_cast %38 : vector<1x1x128xf32> to vector<1x128xf32>
    %40 = vector.broadcast %39 : vector<1x128xf32> to vector<32x128xf32>
    %41 = arith.addf %37, %40 : vector<32x128xf32>
    %cst_37 = arith.constant 0.000000e+00 : f32
    %42 = vector.broadcast %cst_37 : f32 to vector<32x128xf32>
    %43 = arith.maximumf %41, %42 : vector<32x128xf32>
    %44 = arith.truncf %43 : vector<32x128xf32> to vector<32x128xbf16>
    %c1_38 = arith.constant 1 : index
    %c0_39 = arith.constant 0 : index
    %c0_40 = arith.constant 0 : index
    %45 = vector.load %arg3[%c1_38, %c0_39, %c0_40] : memref<3x128x128xbf16, #tpu.memory_space<vmem>>, vector<1x128x128xbf16>
    %46 = vector.shape_cast %45 : vector<1x128x128xbf16> to vector<128x128xbf16>
    %cst_41 = arith.constant dense<0.000000e+00> : vector<32x128xf32>
    %47 = tpu.matmul %44, %46, %cst_41 {dimension_numbers = #tpu.dot_dimension_numbers<[1], [0], [0], [1], [0, 0, 1, 1], [], []>} : vector<32x128xbf16>, vector<128x128xbf16>, vector<32x128xf32> -> vector<32x128xf32>
    %c1_42 = arith.constant 1 : index
    %c0_43 = arith.constant 0 : index
    %c0_44 = arith.constant 0 : index
    %48 = vector.load %arg4[%c1_42, %c0_43, %c0_44] : memref<3x1x128xf32, #tpu.memory_space<vmem>>, vector<1x1x128xf32>
    %49 = vector.shape_cast %48 : vector<1x1x128xf32> to vector<1x128xf32>
    %50 = vector.broadcast %49 : vector<1x128xf32> to vector<32x128xf32>
    %51 = arith.addf %47, %50 : vector<32x128xf32>
    %cst_45 = arith.constant 0.000000e+00 : f32
    %52 = vector.broadcast %cst_45 : f32 to vector<32x128xf32>
    %53 = arith.maximumf %51, %52 : vector<32x128xf32>
    %54 = arith.truncf %53 : vector<32x128xf32> to vector<32x128xbf16>
    %c2_46 = arith.constant 2 : index
    %c0_47 = arith.constant 0 : index
    %c0_48 = arith.constant 0 : index
    %55 = vector.load %arg3[%c2_46, %c0_47, %c0_48] : memref<3x128x128xbf16, #tpu.memory_space<vmem>>, vector<1x128x128xbf16>
    %56 = vector.shape_cast %55 : vector<1x128x128xbf16> to vector<128x128xbf16>
    %cst_49 = arith.constant dense<0.000000e+00> : vector<32x128xf32>
    %57 = tpu.matmul %54, %56, %cst_49 {dimension_numbers = #tpu.dot_dimension_numbers<[1], [0], [0], [1], [0, 0, 1, 1], [], []>} : vector<32x128xbf16>, vector<128x128xbf16>, vector<32x128xf32> -> vector<32x128xf32>
    %c2_50 = arith.constant 2 : index
    %c0_51 = arith.constant 0 : index
    %c0_52 = arith.constant 0 : index
    %58 = vector.load %arg4[%c2_50, %c0_51, %c0_52] : memref<3x1x128xf32, #tpu.memory_space<vmem>>, vector<1x1x128xf32>
    %59 = vector.shape_cast %58 : vector<1x1x128xf32> to vector<1x128xf32>
    %60 = vector.broadcast %59 : vector<1x128xf32> to vector<32x128xf32>
    %61 = arith.addf %57, %60 : vector<32x128xf32>
    %62 = arith.negf %61 : vector<32x128xf32>
    %63 = math.exp %62 : vector<32x128xf32>
    %cst_53 = arith.constant 1.000000e+00 : f32
    %64 = vector.broadcast %cst_53 : f32 to vector<32x128xf32>
    %65 = arith.addf %64, %63 : vector<32x128xf32>
    %66 = arith.divf %64, %65 : vector<32x128xf32>
    %67 = vector.extract_strided_slice %66 {offsets = [0, 0], sizes = [16, 128], strides = [1, 1]} : vector<32x128xf32> to vector<16x128xf32>
    %c0_54 = arith.constant 0 : index
    %c0_55 = arith.constant 0 : index
    %c0_56 = arith.constant 0 : index
    %68 = vector.load %arg10[%c0_54, %c0_55, %c0_56] : memref<2x16x128xf32, #tpu.memory_space<vmem>>, vector<1x16x128xf32>
    %69 = vector.shape_cast %68 : vector<1x16x128xf32> to vector<16x128xf32>
    %70 = vector.shape_cast %67 : vector<16x128xf32> to vector<1x16x128xf32>
    tpu.vector_store %arg10[%c0_54, %c0_55, %c0_56], %70 {strides = array<i32>} : memref<2x16x128xf32, #tpu.memory_space<vmem>>, vector<1x16x128xf32>,
    %71 = vector.extract_strided_slice %66 {offsets = [16, 0], sizes = [16, 128], strides = [1, 1]} : vector<32x128xf32> to vector<16x128xf32>
    %c1_57 = arith.constant 1 : index
    %c0_58 = arith.constant 0 : index
    %c0_59 = arith.constant 0 : index
    %72 = vector.load %arg10[%c1_57, %c0_58, %c0_59] : memref<2x16x128xf32, #tpu.memory_space<vmem>>, vector<1x16x128xf32>
    %73 = vector.shape_cast %72 : vector<1x16x128xf32> to vector<16x128xf32>
    %74 = vector.shape_cast %71 : vector<16x128xf32> to vector<1x16x128xf32>
    tpu.vector_store %arg10[%c1_57, %c0_58, %c0_59], %74 {strides = array<i32>} : memref<2x16x128xf32, #tpu.memory_space<vmem>>, vector<1x16x128xf32>,
    %c0_60 = arith.constant 0 : index
    %c0_61 = arith.constant 0 : index
    %75 = vector.load %arg12[%c0_60, %c0_61] : memref<32x128xf32, #tpu.memory_space<vmem>>, vector<16x128xf32>
    tpu.vector_store %arg12[%c0_60, %c0_61], %0 {strides = array<i32>} : memref<32x128xf32, #tpu.memory_space<vmem>>, vector<16x128xf32>,
    %c16_62 = arith.constant 16 : index
    %c0_63 = arith.constant 0 : index
    %76 = vector.load %arg12[%c16_62, %c0_63] : memref<32x128xf32, #tpu.memory_space<vmem>>, vector<16x128xf32>
    tpu.vector_store %arg12[%c16_62, %c0_63], %67 {strides = array<i32>} : memref<32x128xf32, #tpu.memory_space<vmem>>, vector<16x128xf32>,
    %c0_64 = arith.constant 0 : index
    %c0_65 = arith.constant 0 : index
    %77 = vector.load %arg12[%c0_64, %c0_65] : memref<32x128xf32, #tpu.memory_space<vmem>>, vector<32x128xf32>
    %78 = arith.truncf %77 : vector<32x128xf32> to vector<32x128xbf16>
    %c0_66 = arith.constant 0 : index
    %c0_67 = arith.constant 0 : index
    %c0_68 = arith.constant 0 : index
    %79 = vector.load %arg7[%c0_66, %c0_67, %c0_68] : memref<3x128x128xbf16, #tpu.memory_space<vmem>>, vector<1x128x128xbf16>
    %80 = vector.shape_cast %79 : vector<1x128x128xbf16> to vector<128x128xbf16>
    %cst_69 = arith.constant dense<0.000000e+00> : vector<32x128xf32>
    %81 = tpu.matmul %78, %80, %cst_69 {dimension_numbers = #tpu.dot_dimension_numbers<[1], [0], [0], [1], [0, 0, 1, 1], [], []>} : vector<32x128xbf16>, vector<128x128xbf16>, vector<32x128xf32> -> vector<32x128xf32>
    %c0_70 = arith.constant 0 : index
    %c0_71 = arith.constant 0 : index
    %c0_72 = arith.constant 0 : index
    %82 = vector.load %arg8[%c0_70, %c0_71, %c0_72] : memref<3x1x128xf32, #tpu.memory_space<vmem>>, vector<1x1x128xf32>
    %83 = vector.shape_cast %82 : vector<1x1x128xf32> to vector<1x128xf32>
    %84 = vector.broadcast %83 : vector<1x128xf32> to vector<32x128xf32>
    %85 = arith.addf %81, %84 : vector<32x128xf32>
    %cst_73 = arith.constant 0.000000e+00 : f32
    %86 = vector.broadcast %cst_73 : f32 to vector<32x128xf32>
    %87 = arith.maximumf %85, %86 : vector<32x128xf32>
    %88 = arith.truncf %87 : vector<32x128xf32> to vector<32x128xbf16>
    %c1_74 = arith.constant 1 : index
    %c0_75 = arith.constant 0 : index
    %c0_76 = arith.constant 0 : index
    %89 = vector.load %arg7[%c1_74, %c0_75, %c0_76] : memref<3x128x128xbf16, #tpu.memory_space<vmem>>, vector<1x128x128xbf16>
    %90 = vector.shape_cast %89 : vector<1x128x128xbf16> to vector<128x128xbf16>
    %cst_77 = arith.constant dense<0.000000e+00> : vector<32x128xf32>
    %91 = tpu.matmul %88, %90, %cst_77 {dimension_numbers = #tpu.dot_dimension_numbers<[1], [0], [0], [1], [0, 0, 1, 1], [], []>} : vector<32x128xbf16>, vector<128x128xbf16>, vector<32x128xf32> -> vector<32x128xf32>
    %c1_78 = arith.constant 1 : index
    %c0_79 = arith.constant 0 : index
    %c0_80 = arith.constant 0 : index
    %92 = vector.load %arg8[%c1_78, %c0_79, %c0_80] : memref<3x1x128xf32, #tpu.memory_space<vmem>>, vector<1x1x128xf32>
    %93 = vector.shape_cast %92 : vector<1x1x128xf32> to vector<1x128xf32>
    %94 = vector.broadcast %93 : vector<1x128xf32> to vector<32x128xf32>
    %95 = arith.addf %91, %94 : vector<32x128xf32>
    %cst_81 = arith.constant 0.000000e+00 : f32
    %96 = vector.broadcast %cst_81 : f32 to vector<32x128xf32>
    %97 = arith.maximumf %95, %96 : vector<32x128xf32>
    %98 = arith.truncf %97 : vector<32x128xf32> to vector<32x128xbf16>
    %c2_82 = arith.constant 2 : index
    %c0_83 = arith.constant 0 : index
    %c0_84 = arith.constant 0 : index
    %99 = vector.load %arg7[%c2_82, %c0_83, %c0_84] : memref<3x128x128xbf16, #tpu.memory_space<vmem>>, vector<1x128x128xbf16>
    %100 = vector.shape_cast %99 : vector<1x128x128xbf16> to vector<128x128xbf16>
    %cst_85 = arith.constant dense<0.000000e+00> : vector<32x128xf32>
    %101 = tpu.matmul %98, %100, %cst_85 {dimension_numbers = #tpu.dot_dimension_numbers<[1], [0], [0], [1], [0, 0, 1, 1], [], []>} : vector<32x128xbf16>, vector<128x128xbf16>, vector<32x128xf32> -> vector<32x128xf32>
    %c2_86 = arith.constant 2 : index
    %c0_87 = arith.constant 0 : index
    %c0_88 = arith.constant 0 : index
    %102 = vector.load %arg8[%c2_86, %c0_87, %c0_88] : memref<3x1x128xf32, #tpu.memory_space<vmem>>, vector<1x1x128xf32>
    %103 = vector.shape_cast %102 : vector<1x1x128xf32> to vector<1x128xf32>
    %104 = vector.broadcast %103 : vector<1x128xf32> to vector<32x128xf32>
    %105 = arith.addf %101, %104 : vector<32x128xf32>
    %106 = arith.negf %105 : vector<32x128xf32>
    %107 = math.exp %106 : vector<32x128xf32>
    %cst_89 = arith.constant 1.000000e+00 : f32
    %108 = vector.broadcast %cst_89 : f32 to vector<32x128xf32>
    %109 = arith.addf %108, %107 : vector<32x128xf32>
    %110 = arith.divf %108, %109 : vector<32x128xf32>
    %111 = vector.extract_strided_slice %110 {offsets = [0, 0], sizes = [16, 128], strides = [1, 1]} : vector<32x128xf32> to vector<16x128xf32>
    %c0_90 = arith.constant 0 : index
    %c0_91 = arith.constant 0 : index
    %c0_92 = arith.constant 0 : index
    %112 = vector.load %arg11[%c0_90, %c0_91, %c0_92] : memref<2x16x128xf32, #tpu.memory_space<vmem>>, vector<1x16x128xf32>
    %113 = vector.shape_cast %112 : vector<1x16x128xf32> to vector<16x128xf32>
    %114 = vector.shape_cast %111 : vector<16x128xf32> to vector<1x16x128xf32>
    tpu.vector_store %arg11[%c0_90, %c0_91, %c0_92], %114 {strides = array<i32>} : memref<2x16x128xf32, #tpu.memory_space<vmem>>, vector<1x16x128xf32>,
    %115 = vector.extract_strided_slice %110 {offsets = [16, 0], sizes = [16, 128], strides = [1, 1]} : vector<32x128xf32> to vector<16x128xf32>
    %c1_93 = arith.constant 1 : index
    %c0_94 = arith.constant 0 : index
    %c0_95 = arith.constant 0 : index
    %116 = vector.load %arg11[%c1_93, %c0_94, %c0_95] : memref<2x16x128xf32, #tpu.memory_space<vmem>>, vector<1x16x128xf32>
    %117 = vector.shape_cast %116 : vector<1x16x128xf32> to vector<16x128xf32>
    %118 = vector.shape_cast %115 : vector<16x128xf32> to vector<1x16x128xf32>
    tpu.vector_store %arg11[%c1_93, %c0_94, %c0_95], %118 {strides = array<i32>} : memref<2x16x128xf32, #tpu.memory_space<vmem>>, vector<1x16x128xf32>,
    return
  }
  func.func @transform_0(%arg0: i32) -> (i32, i32) {
    %c0_i32 = arith.constant 0 : i32
    %c0_i32_0 = arith.constant 0 : i32
    return %arg0, %c0_i32 : i32, i32
  }
  func.func @transform_1(%arg0: i32) -> (i32, i32) {
    %c0_i32 = arith.constant 0 : i32
    %c0_i32_0 = arith.constant 0 : i32
    return %arg0, %c0_i32 : i32, i32
  }
  func.func @transform_2(%arg0: i32) -> (i32, i32, i32) {
    %c0_i32 = arith.constant 0 : i32
    %c0_i32_0 = arith.constant 0 : i32
    %c0_i32_1 = arith.constant 0 : i32
    %c0_i32_2 = arith.constant 0 : i32
    return %c0_i32, %c0_i32_0, %c0_i32_1 : i32, i32, i32
  }
  func.func @transform_3(%arg0: i32) -> (i32, i32, i32) {
    %c0_i32 = arith.constant 0 : i32
    %c0_i32_0 = arith.constant 0 : i32
    %c0_i32_1 = arith.constant 0 : i32
    %c0_i32_2 = arith.constant 0 : i32
    return %c0_i32, %c0_i32_0, %c0_i32_1 : i32, i32, i32
  }
  func.func @transform_4(%arg0: i32) -> (i32, i32, i32) {
    %c0_i32 = arith.constant 0 : i32
    %c0_i32_0 = arith.constant 0 : i32
    %c0_i32_1 = arith.constant 0 : i32
    %c0_i32_2 = arith.constant 0 : i32
    return %c0_i32, %c0_i32_0, %c0_i32_1 : i32, i32, i32
  }
  func.func @transform_5(%arg0: i32) -> (i32, i32, i32) {
    %c0_i32 = arith.constant 0 : i32
    %c0_i32_0 = arith.constant 0 : i32
    %c0_i32_1 = arith.constant 0 : i32
    %c0_i32_2 = arith.constant 0 : i32
    return %c0_i32, %c0_i32_0, %c0_i32_1 : i32, i32, i32
  }
  func.func @transform_6(%arg0: i32) -> (i32, i32, i32) {
    %c0_i32 = arith.constant 0 : i32
    %c0_i32_0 = arith.constant 0 : i32
    %c0_i32_1 = arith.constant 0 : i32
    %c0_i32_2 = arith.constant 0 : i32
    return %c0_i32, %c0_i32_0, %c0_i32_1 : i32, i32, i32
  }
  func.func @transform_7(%arg0: i32) -> (i32, i32, i32) {
    %c0_i32 = arith.constant 0 : i32
    %c0_i32_0 = arith.constant 0 : i32
    %c0_i32_1 = arith.constant 0 : i32
    %c0_i32_2 = arith.constant 0 : i32
    return %c0_i32, %c0_i32_0, %c0_i32_1 : i32, i32, i32
  }
  func.func @transform_8(%arg0: i32) -> (i32, i32) {
    %c0_i32 = arith.constant 0 : i32
    %c0_i32_0 = arith.constant 0 : i32
    return %arg0, %c0_i32 : i32, i32
  }
  func.func @transform_9(%arg0: i32) -> (i32, i32, i32) {
    %c0_i32 = arith.constant 0 : i32
    %c0_i32_0 = arith.constant 0 : i32
    %c0_i32_1 = arith.constant 0 : i32
    return %c0_i32, %arg0, %c0_i32_0 : i32, i32, i32
  }
  func.func @transform_10(%arg0: i32) -> (i32, i32, i32) {
    %c0_i32 = arith.constant 0 : i32
    %c0_i32_0 = arith.constant 0 : i32
    %c0_i32_1 = arith.constant 0 : i32
    return %c0_i32, %arg0, %c0_i32_0 : i32, i32, i32
  }
}

</mosaic_0001>

<llo_original>
// kernel: tpu_custom_call.1
$region0: #{tpu_custom_call.1}
  #allocation0 [shape = 'u32[]', space=smem, size = 0x4, offset = 0x4, fixed_abs, tag = 'smem constant byte address 0x4 - core index']
  #allocation1 [shape = 'u32[144,128]{1,0:T(1,128)}', space=vmem, size = 0x12000, scoped, tag = 'internal scratch']
  #allocation2 [shape = 'f32[32,128]{1,0:T(8,128)}', space=vmem, size = 0x4000, scoped, tag = 'scratch operand']
  %s0 = inlined_call_operand.hbm [shape: f32[16,128], index: 0, kind: input, shape index: {}]
  %s1 = inlined_call_operand.hbm [shape: f32[16,128], index: 1, kind: input, shape index: {}]
  %s2 = inlined_call_operand.hbm [shape: bf16[3,128,128], index: 2, kind: input, shape index: {}]
  %s3 = inlined_call_operand.vmem [shape: f32[3,1,128], index: 3, kind: input, shape index: {}]
  %s4 = inlined_call_operand.hbm [shape: bf16[3,128,128], index: 4, kind: input, shape index: {}]
  %s5 = inlined_call_operand.vmem [shape: f32[3,1,128], index: 5, kind: input, shape index: {}]
  %s6 = inlined_call_operand.hbm [shape: bf16[3,128,128], index: 6, kind: input, shape index: {}]
  %s7 = inlined_call_operand.vmem [shape: f32[3,1,128], index: 7, kind: input, shape index: {}]
  %s8 = inlined_call_operand.hbm [shape: f32[16,128], index: 8, kind: output, shape index: {0}]
  %s9 = inlined_call_operand.hbm [shape: f32[2,16,128], index: 9, kind: output, shape index: {1}]
  %s10 = inlined_call_operand.hbm [shape: f32[2,16,128], index: 10, kind: output, shape index: {2}]
  %11 = xla_tuple %s8, %s9, %s10
  %s12 = sld [smem:[#allocation0]]
  $region78: #{tpu_custom_call.1} parent=0
    _
  %s14 = ssub.s32 1, %s12
  %s15 = scalar_select 0, %s14, %s12
  $region1: #{tpu_custom_call.1} parent=0
    #allocation3 [shape = 'u8[8192]{0}', space=vmem, size = 0x2000, scoped, tag = 'input window, operand 0, single buffered']
    #allocation4 [shape = 's32[1]{0}', space=sflag, size = 0x4, scoped, tag = 'scoped memory for tpu_custom_call.1']
    #allocation5 [shape = 's32[1]{0}', space=sflag, size = 0x4, scoped, tag = 'scoped memory for tpu_custom_call.1']
    #allocation6 [shape = 'u8[8192]{0}', space=vmem, size = 0x2000, scoped, tag = 'input window, operand 1, single buffered']
    #allocation7 [shape = 's32[1]{0}', space=sflag, size = 0x4, scoped, tag = 'scoped memory for tpu_custom_call.1']
    #allocation8 [shape = 'u8[98304]{0}', space=vmem, size = 0x18000, scoped, tag = 'input window, operand 2, single buffered']
    #allocation9 [shape = 'u8[98304]{0}', space=vmem, size = 0x18000, scoped, tag = 'input window, operand 4, single buffered']
    #allocation10 [shape = 's32[1]{0}', space=sflag, size = 0x4, scoped, tag = 'scoped memory for tpu_custom_call.1']
    #allocation11 [shape = 'u8[98304]{0}', space=vmem, size = 0x18000, scoped, tag = 'input window, operand 6, single buffered']
    #allocation12 [shape = 'u8[8192]{0}', space=vmem, size = 0x2000, scoped, tag = 'output window, operand 0, single buffered']
    #allocation13 [shape = 'u8[16384]{0}', space=vmem, size = 0x4000, scoped, tag = 'output window, operand 1, single buffered']
    #allocation14 [shape = 's32[1]{0}', space=sflag, size = 0x4, scoped, tag = 'scoped memory for tpu_custom_call.1']
    #allocation15 [shape = 'u8[16384]{0}', space=vmem, size = 0x4000, scoped, tag = 'output window, operand 2, single buffered']
    %16 = vsyncpa [#allocation4], 0
    %17 = vsyncpa [#allocation7], 0
    %18 = vsyncpa [#allocation10], 0
    %19 = vsyncpa [#allocation5], 0
    %20 = vsyncpa [#allocation14], 0
    // Predicated region
    $region2: #{tpu_custom_call.1} parent=1 // pred_check
      _
    $region3: #{tpu_custom_call.1} parent=1 // pred_check_branch
      %22 = sbr.rel (0) target = $region5
    $region4: #{tpu_custom_call.1} parent=1 // pred_region
      %s24 = ssub.s32 256, 256
      %25 = vsyncadd [#allocation4], %s24
      %s26 = sshll.u32 [#allocation3], 4
      %s27 = int_to_ptr.vmem [resolvable:$true] %s26
      %32 = dma.hbm_to_vmem [thread:$0]  %s0, 256, %s27, [#allocation4], 128, 128, 8
    $region5: #{tpu_custom_call.1} parent=1 // pred_fallthru
      _
    // Predicated region
    $region6: #{tpu_custom_call.1} parent=1 // pred_check
      _
    $region7: #{tpu_custom_call.1} parent=1 // pred_check_branch
      %34 = sbr.rel (0) target = $region9
    $region8: #{tpu_custom_call.1} parent=1 // pred_region
      %s36 = ssub.s32 256, 256
      %37 = vsyncadd [#allocation7], %s36
      %s38 = sshll.u32 [#allocation6], 4
      %s39 = int_to_ptr.vmem [resolvable:$true] %s38
      %44 = dma.hbm_to_vmem [thread:$0]  %s1, 256, %s39, [#allocation7], 128, 128, 8
    $region9: #{tpu_custom_call.1} parent=1 // pred_fallthru
      _
    // Predicated region
    $region10: #{tpu_custom_call.1} parent=1 // pred_check
      _
    $region11: #{tpu_custom_call.1} parent=1 // pred_check_branch
      %46 = sbr.rel (0) target = $region13
    $region12: #{tpu_custom_call.1} parent=1 // pred_region
      %s48 = ssub.s32 3072, 3072
      %49 = vsyncadd [#allocation7], %s48
      %s50 = sshll.u32 [#allocation8], 4
      %s51 = int_to_ptr.vmem [resolvable:$true] %s50
      %56 = dma.hbm_to_vmem [thread:$0]  %s2, 3072, %s51, [#allocation7], 64, 64, 4
    $region13: #{tpu_custom_call.1} parent=1 // pred_fallthru
      _
    // Predicated region
    $region14: #{tpu_custom_call.1} parent=1 // pred_check
      _
    $region15: #{tpu_custom_call.1} parent=1 // pred_check_branch
      %58 = sbr.rel (0) target = $region17
    $region16: #{tpu_custom_call.1} parent=1 // pred_region
      _
    $region17: #{tpu_custom_call.1} parent=1 // pred_fallthru
      _
    // Predicated region
    $region18: #{tpu_custom_call.1} parent=1 // pred_check
      _
    $region19: #{tpu_custom_call.1} parent=1 // pred_check_branch
      %60 = sbr.rel (0) target = $region21
    $region20: #{tpu_custom_call.1} parent=1 // pred_region
      %s62 = ssub.s32 3072, 3072
      %63 = vsyncadd [#allocation10], %s62
      %s64 = sshll.u32 [#allocation9], 4
      %s65 = int_to_ptr.vmem [resolvable:$true] %s64
      %70 = dma.hbm_to_vmem [thread:$0]  %s4, 3072, %s65, [#allocation10], 64, 64, 4
    $region21: #{tpu_custom_call.1} parent=1 // pred_fallthru
      _
    // Predicated region
    $region22: #{tpu_custom_call.1} parent=1 // pred_check
      _
    $region23: #{tpu_custom_call.1} parent=1 // pred_check_branch
      %72 = sbr.rel (0) target = $region25
    $region24: #{tpu_custom_call.1} parent=1 // pred_region
      _
    $region25: #{tpu_custom_call.1} parent=1 // pred_fallthru
      _
    // Predicated region
    $region26: #{tpu_custom_call.1} parent=1 // pred_check
      _
    $region27: #{tpu_custom_call.1} parent=1 // pred_check_branch
      %74 = sbr.rel (0) target = $region29
    $region28: #{tpu_custom_call.1} parent=1 // pred_region
      %s76 = ssub.s32 3072, 3072
      %77 = vsyncadd [#allocation10], %s76
      %s78 = sshll.u32 [#allocation11], 4
      %s79 = int_to_ptr.vmem [resolvable:$true] %s78
      %84 = dma.hbm_to_vmem [thread:$0]  %s6, 3072, %s79, [#allocation10], 64, 64, 4
    $region29: #{tpu_custom_call.1} parent=1 // pred_fallthru
      _
    // Predicated region
    $region30: #{tpu_custom_call.1} parent=1 // pred_check
      _
    $region31: #{tpu_custom_call.1} parent=1 // pred_check_branch
      %86 = sbr.rel (0) target = $region33
    $region32: #{tpu_custom_call.1} parent=1 // pred_region
      _
    $region33: #{tpu_custom_call.1} parent=1 // pred_fallthru
      _
    // Predicated region
    $region34: #{tpu_custom_call.1} parent=1 // pred_check
      _
    $region35: #{tpu_custom_call.1} parent=1 // pred_check_branch
      %88 = sbr.rel (0) target = $region37
    $region36: #{tpu_custom_call.1} parent=1 // pred_region
      %89 = dma.done [#allocation4], 256
    $region37: #{tpu_custom_call.1} parent=1 // pred_fallthru
      _
    // Predicated region
    $region38: #{tpu_custom_call.1} parent=1 // pred_check
      _
    $region39: #{tpu_custom_call.1} parent=1 // pred_check_branch
      %91 = sbr.rel (0) target = $region41
    $region40: #{tpu_custom_call.1} parent=1 // pred_region
      %92 = dma.done [#allocation7], 256
    $region41: #{tpu_custom_call.1} parent=1 // pred_fallthru
      _
    // Predicated region
    $region42: #{tpu_custom_call.1} parent=1 // pred_check
      _
    $region43: #{tpu_custom_call.1} parent=1 // pred_check_branch
      %94 = sbr.rel (0) target = $region45
    $region44: #{tpu_custom_call.1} parent=1 // pred_region
      %95 = dma.done [#allocation7], 3072
    $region45: #{tpu_custom_call.1} parent=1 // pred_fallthru
      _
    // Predicated region
    $region46: #{tpu_custom_call.1} parent=1 // pred_check
      _
    $region47: #{tpu_custom_call.1} parent=1 // pred_check_branch
      %97 = sbr.rel (0) target = $region49
    $region48: #{tpu_custom_call.1} parent=1 // pred_region
      %98 = dma.done [#allocation10], 3072
    $region49: #{tpu_custom_call.1} parent=1 // pred_fallthru
      _
    // Predicated region
    $region50: #{tpu_custom_call.1} parent=1 // pred_check
      _
    $region51: #{tpu_custom_call.1} parent=1 // pred_check_branch
      %100 = sbr.rel (0) target = $region53
    $region52: #{tpu_custom_call.1} parent=1 // pred_region
      %101 = dma.done [#allocation10], 3072
    $region53: #{tpu_custom_call.1} parent=1 // pred_fallthru
      _
    %v103 = vld [vmem:[#allocation3] sm:$0xff]
    %v104 = vld [vmem:[#allocation3 + $0x8] sm:$0xff]
    %v105 = vld [vmem:[#allocation6] sm:$0xff]
    %v106 = vld [vmem:[#allocation6 + $0x8] sm:$0xff]
    %v107 = vpack.c.bf16 %v104, %v103
    %v108 = vld [vmem:[#allocation9] sm:$0xf]
    %v109 = vld [vmem:[#allocation9 + $0x4] sm:$0xf]
    %v110 = vld [vmem:[#allocation9 + $0x8] sm:$0xf]
    %v111 = vld [vmem:[#allocation9 + $0xc] sm:$0xf]
    %v112 = vld [vmem:[#allocation9 + $0x10] sm:$0xf]
    %v113 = vld [vmem:[#allocation9 + $0x14] sm:$0xf]
    %v114 = vld [vmem:[#allocation9 + $0x18] sm:$0xf]
    %v115 = vld [vmem:[#allocation9 + $0x1c] sm:$0xf]
    %v116 = vld [vmem:[#allocation9 + $0x20] sm:$0xf]
    %v117 = vld [vmem:[#allocation9 + $0x24] sm:$0xf]
    %v118 = vld [vmem:[#allocation9 + $0x28] sm:$0xf]
    %v119 = vld [vmem:[#allocation9 + $0x2c] sm:$0xf]
    %v120 = vld [vmem:[#allocation9 + $0x30] sm:$0xf]
    %v121 = vld [vmem:[#allocation9 + $0x34] sm:$0xf]
    %v122 = vld [vmem:[#allocation9 + $0x38] sm:$0xf]
    %v123 = vld [vmem:[#allocation9 + $0x3c] sm:$0xf]
    %v124 = vld [vmem:[%s5] sm:$0x1]
    %v126 = vlaneseq
    %v127 = vshrl.u32 %v126, 7
    %v128 = vsub.s32 0, %v127
    %v129 = vrot.slane %v124, %v128
    %v147 = vunpack.c.l.b16 %v108
    %v148 = vunpack.c.l.b16 %v109
    %v149 = vunpack.c.l.b16 %v110
    %v150 = vunpack.c.l.b16 %v111
    %v151 = vunpack.c.l.b16 %v112
    %v152 = vunpack.c.l.b16 %v113
    %v153 = vunpack.c.l.b16 %v114
    %v154 = vunpack.c.l.b16 %v115
    %v155 = vunpack.c.l.b16 %v116
    %v156 = vunpack.c.l.b16 %v117
    %v157 = vunpack.c.l.b16 %v118
    %v158 = vunpack.c.l.b16 %v119
    %v159 = vunpack.c.l.b16 %v120
    %v160 = vunpack.c.l.b16 %v121
    %v161 = vunpack.c.l.b16 %v122
    %v162 = vunpack.c.l.b16 %v123
    %v163 = vpack.c.b16 %v148, %v147
    %v164 = vpack.c.b16 %v150, %v149
    %v165 = vpack.c.b16 %v152, %v151
    %v166 = vpack.c.b16 %v154, %v153
    %v167 = vpack.c.b16 %v156, %v155
    %v168 = vpack.c.b16 %v158, %v157
    %v169 = vpack.c.b16 %v160, %v159
    %v170 = vpack.c.b16 %v162, %v161
    %179 = vmatprep.subr.bf16.mxu0 0
    %180 = vmatpush1.bf16.msra.mxu0 %v163
    %181 = vmatprep.subr.bf16.mxu0 0
    %182 = vmatpush1.bf16.msra.mxu0 %v164
    %183 = vmatprep.subr.bf16.mxu0 0
    %184 = vmatpush1.bf16.msra.mxu0 %v165
    %185 = vmatprep.subr.bf16.mxu0 0
    %186 = vmatpush1.bf16.msra.mxu0 %v166
    %187 = vmatprep.subr.bf16.mxu0 0
    %188 = vmatpush1.bf16.msra.mxu0 %v167
    %189 = vmatprep.subr.bf16.mxu0 0
    %190 = vmatpush1.bf16.msra.mxu0 %v168
    %191 = vmatprep.subr.bf16.mxu0 0
    %192 = vmatpush1.bf16.msra.mxu0 %v169
    %193 = vmatprep.subr.bf16.mxu0 0
    %194 = vmatpush1.bf16.msra.mxu0 %v170
    %195 = vmatprep.subr.bf16.mxu0 0
    %196 = vmatpush1.bf16.msra.mxu0 0
    %197 = vmatprep.subr.bf16.mxu0 0
    %198 = vmatpush1.bf16.msra.mxu0 0
    %199 = vmatprep.subr.bf16.mxu0 0
    %200 = vmatpush1.bf16.msra.mxu0 0
    %201 = vmatprep.subr.bf16.mxu0 0
    %202 = vmatpush1.bf16.msra.mxu0 0
    %203 = vmatprep.subr.bf16.mxu0 0
    %204 = vmatpush1.bf16.msra.mxu0 0
    %205 = vmatprep.subr.bf16.mxu0 0
    %206 = vmatpush1.bf16.msra.mxu0 0
    %207 = vmatprep.subr.bf16.mxu0 0
    %208 = vmatpush1.bf16.msra.mxu0 0
    %209 = vmatprep.subr.bf16.mxu0 0
    %210 = vmatpush1.bf16.msra.mxu0 0
    %211 = vmatprep.mubr.bf16.mxu0 0
    %212 = vmatmul.mubr.bf16.gmra.mrb[0].mxu0 %v107
    %v213 = vpop.f32.mrb[0].mxu0
    %v214 = vadd.f32 %v129, %v213
    %v215 = vpop.f32.mrb[0].mxu0
    %v216 = vpop.f32.mrb[0].mxu0
    %v217 = vadd.f32 %v129, %v216
    %v218 = vpop.f32.mrb[0].mxu0
    %219 = vdwg.mxu0
    %v220 = vmax.f32 %v214, 0.0
    %v221 = vmax.f32 %v217, 0.0
    %v222 = vpack.c.bf16 %v221, %v220
    %s223 = scalar_lea.vmem [#allocation9], 64
    %v224 = vld [vmem:[%s223] sm:$0xf]
    %v225 = vld [vmem:[%s223 + $0x4] sm:$0xf]
    %v226 = vld [vmem:[%s223 + $0x8] sm:$0xf]
    %v227 = vld [vmem:[%s223 + $0xc] sm:$0xf]
    %v228 = vld [vmem:[%s223 + $0x10] sm:$0xf]
    %v229 = vld [vmem:[%s223 + $0x14] sm:$0xf]
    %v230 = vld [vmem:[%s223 + $0x18] sm:$0xf]
    %v231 = vld [vmem:[%s223 + $0x1c] sm:$0xf]
    %v232 = vld [vmem:[%s223 + $0x20] sm:$0xf]
    %v233 = vld [vmem:[%s223 + $0x24] sm:$0xf]
    %v234 = vld [vmem:[%s223 + $0x28] sm:$0xf]
    %v235 = vld [vmem:[%s223 + $0x2c] sm:$0xf]
    %v236 = vld [vmem:[%s223 + $0x30] sm:$0xf]
    %v237 = vld [vmem:[%s223 + $0x34] sm:$0xf]
    %v238 = vld [vmem:[%s223 + $0x38] sm:$0xf]
    %v239 = vld [vmem:[%s223 + $0x3c] sm:$0xf]
    %s240 = scalar_lea.vmem %s5, 1
    %v241 = vld [vmem:[%s240] sm:$0x1]
    %v243 = vlaneseq
    %v244 = vshrl.u32 %v243, 7
    %v245 = vsub.s32 0, %v244
    %v246 = vrot.slane %v241, %v245
    %v264 = vunpack.c.l.b16 %v224
    %v265 = vunpack.c.l.b16 %v225
    %v266 = vunpack.c.l.b16 %v226
    %v267 = vunpack.c.l.b16 %v227
    %v268 = vunpack.c.l.b16 %v228
    %v269 = vunpack.c.l.b16 %v229
    %v270 = vunpack.c.l.b16 %v230
    %v271 = vunpack.c.l.b16 %v231
    %v272 = vunpack.c.l.b16 %v232
    %v273 = vunpack.c.l.b16 %v233
    %v274 = vunpack.c.l.b16 %v234
    %v275 = vunpack.c.l.b16 %v235
    %v276 = vunpack.c.l.b16 %v236
    %v277 = vunpack.c.l.b16 %v237
    %v278 = vunpack.c.l.b16 %v238
    %v279 = vunpack.c.l.b16 %v239
    %v280 = vpack.c.b16 %v265, %v264
    %v281 = vpack.c.b16 %v267, %v266
    %v282 = vpack.c.b16 %v269, %v268
    %v283 = vpack.c.b16 %v271, %v270
    %v284 = vpack.c.b16 %v273, %v272
    %v285 = vpack.c.b16 %v275, %v274
    %v286 = vpack.c.b16 %v277, %v276
    %v287 = vpack.c.b16 %v279, %v278
    %296 = vmatprep.subr.bf16.mxu0 0
    %297 = vmatpush1.bf16.msra.mxu0 %v280
    %298 = vmatprep.subr.bf16.mxu0 0
    %299 = vmatpush1.bf16.msra.mxu0 %v281
    %300 = vmatprep.subr.bf16.mxu0 0
    %301 = vmatpush1.bf16.msra.mxu0 %v282
    %302 = vmatprep.subr.bf16.mxu0 0
    %303 = vmatpush1.bf16.msra.mxu0 %v283
    %304 = vmatprep.subr.bf16.mxu0 0
    %305 = vmatpush1.bf16.msra.mxu0 %v284
    %306 = vmatprep.subr.bf16.mxu0 0
    %307 = vmatpush1.bf16.msra.mxu0 %v285
    %308 = vmatprep.subr.bf16.mxu0 0
    %309 = vmatpush1.bf16.msra.mxu0 %v286
    %310 = vmatprep.subr.bf16.mxu0 0
    %311 = vmatpush1.bf16.msra.mxu0 %v287
    %312 = vmatprep.subr.bf16.mxu0 0
    %313 = vmatpush1.bf16.msra.mxu0 0
    %314 = vmatprep.subr.bf16.mxu0 0
    %315 = vmatpush1.bf16.msra.mxu0 0
    %316 = vmatprep.subr.bf16.mxu0 0
    %317 = vmatpush1.bf16.msra.mxu0 0
    %318 = vmatprep.subr.bf16.mxu0 0
    %319 = vmatpush1.bf16.msra.mxu0 0
    %320 = vmatprep.subr.bf16.mxu0 0
    %321 = vmatpush1.bf16.msra.mxu0 0
    %322 = vmatprep.subr.bf16.mxu0 0
    %323 = vmatpush1.bf16.msra.mxu0 0
    %324 = vmatprep.subr.bf16.mxu0 0
    %325 = vmatpush1.bf16.msra.mxu0 0
    %326 = vmatprep.subr.bf16.mxu0 0
    %327 = vmatpush1.bf16.msra.mxu0 0
    %328 = vmatprep.mubr.bf16.mxu0 0
    %329 = vmatmul.mubr.bf16.gmra.mrb[0].mxu0 %v222
    %v330 = vpop.f32.mrb[0].mxu0
    %v331 = vadd.f32 %v246, %v330
    %v332 = vpop.f32.mrb[0].mxu0
    %v333 = vpop.f32.mrb[0].mxu0
    %v334 = vadd.f32 %v246, %v333
    %v335 = vpop.f32.mrb[0].mxu0
    %336 = vdwg.mxu0
    %v337 = vmax.f32 %v331, 0.0
    %v338 = vmax.f32 %v334, 0.0
    %v339 = vpack.c.bf16 %v338, %v337
    %s340 = scalar_lea.vmem [#allocation9], 128
    %v341 = vld [vmem:[%s340] sm:$0xf]
    %v342 = vld [vmem:[%s340 + $0x4] sm:$0xf]
    %v343 = vld [vmem:[%s340 + $0x8] sm:$0xf]
    %v344 = vld [vmem:[%s340 + $0xc] sm:$0xf]
    %v345 = vld [vmem:[%s340 + $0x10] sm:$0xf]
    %v346 = vld [vmem:[%s340 + $0x14] sm:$0xf]
    %v347 = vld [vmem:[%s340 + $0x18] sm:$0xf]
    %v348 = vld [vmem:[%s340 + $0x1c] sm:$0xf]
    %v349 = vld [vmem:[%s340 + $0x20] sm:$0xf]
    %v350 = vld [vmem:[%s340 + $0x24] sm:$0xf]
    %v351 = vld [vmem:[%s340 + $0x28] sm:$0xf]
    %v352 = vld [vmem:[%s340 + $0x2c] sm:$0xf]
    %v353 = vld [vmem:[%s340 + $0x30] sm:$0xf]
    %v354 = vld [vmem:[%s340 + $0x34] sm:$0xf]
    %v355 = vld [vmem:[%s340 + $0x38] sm:$0xf]
    %v356 = vld [vmem:[%s340 + $0x3c] sm:$0xf]
    %s357 = scalar_lea.vmem %s5, 2
    %v358 = vld [vmem:[%s357] sm:$0x1]
    %v360 = vlaneseq
    %v361 = vshrl.u32 %v360, 7
    %v362 = vsub.s32 0, %v361
    %v363 = vrot.slane %v358, %v362
    %v381 = vunpack.c.l.b16 %v341
    %v382 = vunpack.c.l.b16 %v342
    %v383 = vunpack.c.l.b16 %v343
    %v384 = vunpack.c.l.b16 %v344
    %v385 = vunpack.c.l.b16 %v345
    %v386 = vunpack.c.l.b16 %v346
    %v387 = vunpack.c.l.b16 %v347
    %v388 = vunpack.c.l.b16 %v348
    %v389 = vunpack.c.l.b16 %v349
    %v390 = vunpack.c.l.b16 %v350
    %v391 = vunpack.c.l.b16 %v351
    %v392 = vunpack.c.l.b16 %v352
    %v393 = vunpack.c.l.b16 %v353
    %v394 = vunpack.c.l.b16 %v354
    %v395 = vunpack.c.l.b16 %v355
    %v396 = vunpack.c.l.b16 %v356
    %v397 = vpack.c.b16 %v382, %v381
    %v398 = vpack.c.b16 %v384, %v383
    %v399 = vpack.c.b16 %v386, %v385
    %v400 = vpack.c.b16 %v388, %v387
    %v401 = vpack.c.b16 %v390, %v389
    %v402 = vpack.c.b16 %v392, %v391
    %v403 = vpack.c.b16 %v394, %v393
    %v404 = vpack.c.b16 %v396, %v395
    %413 = vmatprep.subr.bf16.mxu0 0
    %414 = vmatpush1.bf16.msra.mxu0 %v397
    %415 = vmatprep.subr.bf16.mxu0 0
    %416 = vmatpush1.bf16.msra.mxu0 %v398
    %417 = vmatprep.subr.bf16.mxu0 0
    %418 = vmatpush1.bf16.msra.mxu0 %v399
    %419 = vmatprep.subr.bf16.mxu0 0
    %420 = vmatpush1.bf16.msra.mxu0 %v400
    %421 = vmatprep.subr.bf16.mxu0 0
    %422 = vmatpush1.bf16.msra.mxu0 %v401
    %423 = vmatprep.subr.bf16.mxu0 0
    %424 = vmatpush1.bf16.msra.mxu0 %v402
    %425 = vmatprep.subr.bf16.mxu0 0
    %426 = vmatpush1.bf16.msra.mxu0 %v403
    %427 = vmatprep.subr.bf16.mxu0 0
    %428 = vmatpush1.bf16.msra.mxu0 %v404
    %429 = vmatprep.subr.bf16.mxu0 0
    %430 = vmatpush1.bf16.msra.mxu0 0
    %431 = vmatprep.subr.bf16.mxu0 0
    %432 = vmatpush1.bf16.msra.mxu0 0
    %433 = vmatprep.subr.bf16.mxu0 0
    %434 = vmatpush1.bf16.msra.mxu0 0
    %435 = vmatprep.subr.bf16.mxu0 0
    %436 = vmatpush1.bf16.msra.mxu0 0
    %437 = vmatprep.subr.bf16.mxu0 0
    %438 = vmatpush1.bf16.msra.mxu0 0
    %439 = vmatprep.subr.bf16.mxu0 0
    %440 = vmatpush1.bf16.msra.mxu0 0
    %441 = vmatprep.subr.bf16.mxu0 0
    %442 = vmatpush1.bf16.msra.mxu0 0
    %443 = vmatprep.subr.bf16.mxu0 0
    %444 = vmatpush1.bf16.msra.mxu0 0
    %445 = vmatprep.mubr.bf16.mxu0 0
    %446 = vmatmul.mubr.bf16.gmra.mrb[0].mxu0 %v339
    %v447 = vpop.f32.mrb[0].mxu0
    %v448 = vadd.f32 %v363, %v447
    %v449 = vpop.f32.mrb[0].mxu0
    %v450 = vpop.f32.mrb[0].mxu0
    %v451 = vadd.f32 %v363, %v450
    %v452 = vpop.f32.mrb[0].mxu0
    %453 = vdwg.mxu0
    %454 = vst [vmem:[#allocation12] sm:$0xff] %v448
    %455 = vst [vmem:[#allocation12 + $0x8] sm:$0xff] %v451
    %456 = vst [vmem:[#allocation2] sm:$0xff] %v105
    %457 = vst [vmem:[#allocation2 + $0x8] sm:$0xff] %v106
    %458 = vst [vmem:[#allocation2 + $0x10] sm:$0xff] %v448
    %459 = vst [vmem:[#allocation2 + $0x18] sm:$0xff] %v451
    %v460 = vld [vmem:[#allocation2] sm:$0xff]
    %v461 = vld [vmem:[#allocation2 + $0x8] sm:$0xff]
    %v462 = vld [vmem:[#allocation2 + $0x10] sm:$0xff]
    %v463 = vld [vmem:[#allocation2 + $0x18] sm:$0xff]
    %v464 = vpack.c.bf16 %v461, %v460
    %v465 = vpack.c.bf16 %v463, %v462
    %v466 = vld [vmem:[#allocation8] sm:$0xf]
    %v467 = vld [vmem:[#allocation8 + $0x4] sm:$0xf]
    %v468 = vld [vmem:[#allocation8 + $0x8] sm:$0xf]
    %v469 = vld [vmem:[#allocation8 + $0xc] sm:$0xf]
    %v470 = vld [vmem:[#allocation8 + $0x10] sm:$0xf]
    %v471 = vld [vmem:[#allocation8 + $0x14] sm:$0xf]
    %v472 = vld [vmem:[#allocation8 + $0x18] sm:$0xf]
    %v473 = vld [vmem:[#allocation8 + $0x1c] sm:$0xf]
    %v474 = vld [vmem:[#allocation8 + $0x20] sm:$0xf]
    %v475 = vld [vmem:[#allocation8 + $0x24] sm:$0xf]
    %v476 = vld [vmem:[#allocation8 + $0x28] sm:$0xf]
    %v477 = vld [vmem:[#allocation8 + $0x2c] sm:$0xf]
    %v478 = vld [vmem:[#allocation8 + $0x30] sm:$0xf]
    %v479 = vld [vmem:[#allocation8 + $0x34] sm:$0xf]
    %v480 = vld [vmem:[#allocation8 + $0x38] sm:$0xf]
    %v481 = vld [vmem:[#allocation8 + $0x3c] sm:$0xf]
    %v482 = vld [vmem:[%s3] sm:$0x1]
    %v484 = vlaneseq
    %v485 = vshrl.u32 %v484, 7
    %v486 = vsub.s32 0, %v485
    %v487 = vrot.slane %v482, %v486
    %v505 = vunpack.c.l.b16 %v466
    %v506 = vunpack.c.l.b16 %v467
    %v507 = vunpack.c.l.b16 %v468
    %v508 = vunpack.c.l.b16 %v469
    %v509 = vunpack.c.l.b16 %v470
    %v510 = vunpack.c.l.b16 %v471
    %v511 = vunpack.c.l.b16 %v472
    %v512 = vunpack.c.l.b16 %v473
    %v513 = vunpack.c.l.b16 %v474
    %v514 = vunpack.c.l.b16 %v475
    %v515 = vunpack.c.l.b16 %v476
    %v516 = vunpack.c.l.b16 %v477
    %v517 = vunpack.c.l.b16 %v478
    %v518 = vunpack.c.l.b16 %v479
    %v519 = vunpack.c.l.b16 %v480
    %v520 = vunpack.c.l.b16 %v481
    %v521 = vpack.c.b16 %v506, %v505
    %v522 = vpack.c.b16 %v508, %v507
    %v523 = vpack.c.b16 %v510, %v509
    %v524 = vpack.c.b16 %v512, %v511
    %v525 = vpack.c.b16 %v514, %v513
    %v526 = vpack.c.b16 %v516, %v515
    %v527 = vpack.c.b16 %v518, %v517
    %v528 = vpack.c.b16 %v520, %v519
    %537 = vmatprep.subr.bf16.mxu0 0
    %538 = vmatpush1.bf16.msra.mxu0 %v521
    %539 = vmatprep.subr.bf16.mxu0 0
    %540 = vmatpush1.bf16.msra.mxu0 %v522
    %541 = vmatprep.subr.bf16.mxu0 0
    %542 = vmatpush1.bf16.msra.mxu0 %v523
    %543 = vmatprep.subr.bf16.mxu0 0
    %544 = vmatpush1.bf16.msra.mxu0 %v524
    %545 = vmatprep.subr.bf16.mxu0 0
    %546 = vmatpush1.bf16.msra.mxu0 %v525
    %547 = vmatprep.subr.bf16.mxu0 0
    %548 = vmatpush1.bf16.msra.mxu0 %v526
    %549 = vmatprep.subr.bf16.mxu0 0
    %550 = vmatpush1.bf16.msra.mxu0 %v527
    %551 = vmatprep.subr.bf16.mxu0 0
    %552 = vmatpush1.bf16.msra.mxu0 %v528
    %553 = vmatprep.subr.bf16.mxu0 0
    %554 = vmatpush1.bf16.msra.mxu0 0
    %555 = vmatprep.subr.bf16.mxu0 0
    %556 = vmatpush1.bf16.msra.mxu0 0
    %557 = vmatprep.subr.bf16.mxu0 0
    %558 = vmatpush1.bf16.msra.mxu0 0
    %559 = vmatprep.subr.bf16.mxu0 0
    %560 = vmatpush1.bf16.msra.mxu0 0
    %561 = vmatprep.subr.bf16.mxu0 0
    %562 = vmatpush1.bf16.msra.mxu0 0
    %563 = vmatprep.subr.bf16.mxu0 0
    %564 = vmatpush1.bf16.msra.mxu0 0
    %565 = vmatprep.subr.bf16.mxu0 0
    %566 = vmatpush1.bf16.msra.mxu0 0
    %567 = vmatprep.subr.bf16.mxu0 0
    %568 = vmatpush1.bf16.msra.mxu0 0
    %569 = vmatprep.mubr.bf16.mxu0 0
    %570 = vmatmul.mubr.bf16.gmra.mrb[0].mxu0 %v464
    %v571 = vpop.f32.mrb[0].mxu0
    %v572 = vadd.f32 %v487, %v571
    %v573 = vpop.f32.mrb[0].mxu0
    %v574 = vpop.f32.mrb[0].mxu0
    %v575 = vadd.f32 %v487, %v574
    %v576 = vpop.f32.mrb[0].mxu0
    %577 = vmatprep.mubr.bf16.mxu0 0
    %578 = vmatmul.mubr.bf16.gmra.mrb[0].mxu0 %v465
    %v579 = vpop.f32.mrb[0].mxu0
    %v580 = vadd.f32 %v487, %v579
    %v581 = vpop.f32.mrb[0].mxu0
    %v582 = vpop.f32.mrb[0].mxu0
    %v583 = vadd.f32 %v487, %v582
    %v584 = vpop.f32.mrb[0].mxu0
    %585 = vdwg.mxu0
    %v586 = vmax.f32 %v572, 0.0
    %v587 = vmax.f32 %v575, 0.0
    %v588 = vmax.f32 %v580, 0.0
    %v589 = vmax.f32 %v583, 0.0
    %v590 = vpack.c.bf16 %v587, %v586
    %v591 = vpack.c.bf16 %v589, %v588
    %s592 = scalar_lea.vmem [#allocation8], 64
    %v593 = vld [vmem:[%s592] sm:$0xf]
    %v594 = vld [vmem:[%s592 + $0x4] sm:$0xf]
    %v595 = vld [vmem:[%s592 + $0x8] sm:$0xf]
    %v596 = vld [vmem:[%s592 + $0xc] sm:$0xf]
    %v597 = vld [vmem:[%s592 + $0x10] sm:$0xf]
    %v598 = vld [vmem:[%s592 + $0x14] sm:$0xf]
    %v599 = vld [vmem:[%s592 + $0x18] sm:$0xf]
    %v600 = vld [vmem:[%s592 + $0x1c] sm:$0xf]
    %v601 = vld [vmem:[%s592 + $0x20] sm:$0xf]
    %v602 = vld [vmem:[%s592 + $0x24] sm:$0xf]
    %v603 = vld [vmem:[%s592 + $0x28] sm:$0xf]
    %v604 = vld [vmem:[%s592 + $0x2c] sm:$0xf]
    %v605 = vld [vmem:[%s592 + $0x30] sm:$0xf]
    %v606 = vld [vmem:[%s592 + $0x34] sm:$0xf]
    %v607 = vld [vmem:[%s592 + $0x38] sm:$0xf]
    %v608 = vld [vmem:[%s592 + $0x3c] sm:$0xf]
    %s609 = scalar_lea.vmem %s3, 1
    %v610 = vld [vmem:[%s609] sm:$0x1]
    %v612 = vlaneseq
    %v613 = vshrl.u32 %v612, 7
    %v614 = vsub.s32 0, %v613
    %v615 = vrot.slane %v610, %v614
    %v633 = vunpack.c.l.b16 %v593
    %v634 = vunpack.c.l.b16 %v594
    %v635 = vunpack.c.l.b16 %v595
    %v636 = vunpack.c.l.b16 %v596
    %v637 = vunpack.c.l.b16 %v597
    %v638 = vunpack.c.l.b16 %v598
    %v639 = vunpack.c.l.b16 %v599
    %v640 = vunpack.c.l.b16 %v600
    %v641 = vunpack.c.l.b16 %v601
    %v642 = vunpack.c.l.b16 %v602
    %v643 = vunpack.c.l.b16 %v603
    %v644 = vunpack.c.l.b16 %v604
    %v645 = vunpack.c.l.b16 %v605
    %v646 = vunpack.c.l.b16 %v606
    %v647 = vunpack.c.l.b16 %v607
    %v648 = vunpack.c.l.b16 %v608
    %v649 = vpack.c.b16 %v634, %v633
    %v650 = vpack.c.b16 %v636, %v635
    %v651 = vpack.c.b16 %v638, %v637
    %v652 = vpack.c.b16 %v640, %v639
    %v653 = vpack.c.b16 %v642, %v641
    %v654 = vpack.c.b16 %v644, %v643
    %v655 = vpack.c.b16 %v646, %v645
    %v656 = vpack.c.b16 %v648, %v647
    %665 = vmatprep.subr.bf16.mxu0 0
    %666 = vmatpush1.bf16.msra.mxu0 %v649
    %667 = vmatprep.subr.bf16.mxu0 0
    %668 = vmatpush1.bf16.msra.mxu0 %v650
    %669 = vmatprep.subr.bf16.mxu0 0
    %670 = vmatpush1.bf16.msra.mxu0 %v651
    %671 = vmatprep.subr.bf16.mxu0 0
    %672 = vmatpush1.bf16.msra.mxu0 %v652
    %673 = vmatprep.subr.bf16.mxu0 0
    %674 = vmatpush1.bf16.msra.mxu0 %v653
    %675 = vmatprep.subr.bf16.mxu0 0
    %676 = vmatpush1.bf16.msra.mxu0 %v654
    %677 = vmatprep.subr.bf16.mxu0 0
    %678 = vmatpush1.bf16.msra.mxu0 %v655
    %679 = vmatprep.subr.bf16.mxu0 0
    %680 = vmatpush1.bf16.msra.mxu0 %v656
    %681 = vmatprep.subr.bf16.mxu0 0
    %682 = vmatpush1.bf16.msra.mxu0 0
    %683 = vmatprep.subr.bf16.mxu0 0
    %684 = vmatpush1.bf16.msra.mxu0 0
    %685 = vmatprep.subr.bf16.mxu0 0
    %686 = vmatpush1.bf16.msra.mxu0 0
    %687 = vmatprep.subr.bf16.mxu0 0
    %688 = vmatpush1.bf16.msra.mxu0 0
    %689 = vmatprep.subr.bf16.mxu0 0
    %690 = vmatpush1.bf16.msra.mxu0 0
    %691 = vmatprep.subr.bf16.mxu0 0
    %692 = vmatpush1.bf16.msra.mxu0 0
    %693 = vmatprep.subr.bf16.mxu0 0
    %694 = vmatpush1.bf16.msra.mxu0 0
    %695 = vmatprep.subr.bf16.mxu0 0
    %696 = vmatpush1.bf16.msra.mxu0 0
    %697 = vmatprep.mubr.bf16.mxu0 0
    %698 = vmatmul.mubr.bf16.gmra.mrb[0].mxu0 %v590
    %v699 = vpop.f32.mrb[0].mxu0
    %v700 = vadd.f32 %v615, %v699
    %v701 = vpop.f32.mrb[0].mxu0
    %v702 = vpop.f32.mrb[0].mxu0
    %v703 = vadd.f32 %v615, %v702
    %v704 = vpop.f32.mrb[0].mxu0
    %705 = vmatprep.mubr.bf16.mxu0 0
    %706 = vmatmul.mubr.bf16.gmra.mrb[0].mxu0 %v591
    %v707 = vpop.f32.mrb[0].mxu0
    %v708 = vadd.f32 %v615, %v707
    %v709 = vpop.f32.mrb[0].mxu0
    %v710 = vpop.f32.mrb[0].mxu0
    %v711 = vadd.f32 %v615, %v710
    %v712 = vpop.f32.mrb[0].mxu0
    %713 = vdwg.mxu0
    %v714 = vmax.f32 %v700, 0.0
    %v715 = vmax.f32 %v703, 0.0
    %v716 = vmax.f32 %v708, 0.0
    %v717 = vmax.f32 %v711, 0.0
    %v718 = vpack.c.bf16 %v715, %v714
    %v719 = vpack.c.bf16 %v717, %v716
    %s720 = scalar_lea.vmem [#allocation8], 128
    %v721 = vld [vmem:[%s720] sm:$0xf]
    %v722 = vld [vmem:[%s720 + $0x4] sm:$0xf]
    %v723 = vld [vmem:[%s720 + $0x8] sm:$0xf]
    %v724 = vld [vmem:[%s720 + $0xc] sm:$0xf]
    %v725 = vld [vmem:[%s720 + $0x10] sm:$0xf]
    %v726 = vld [vmem:[%s720 + $0x14] sm:$0xf]
    %v727 = vld [vmem:[%s720 + $0x18] sm:$0xf]
    %v728 = vld [vmem:[%s720 + $0x1c] sm:$0xf]
    %v729 = vld [vmem:[%s720 + $0x20] sm:$0xf]
    %v730 = vld [vmem:[%s720 + $0x24] sm:$0xf]
    %v731 = vld [vmem:[%s720 + $0x28] sm:$0xf]
    %v732 = vld [vmem:[%s720 + $0x2c] sm:$0xf]
    %v733 = vld [vmem:[%s720 + $0x30] sm:$0xf]
    %v734 = vld [vmem:[%s720 + $0x34] sm:$0xf]
    %v735 = vld [vmem:[%s720 + $0x38] sm:$0xf]
    %v736 = vld [vmem:[%s720 + $0x3c] sm:$0xf]
    %s737 = scalar_lea.vmem %s3, 2
    %v738 = vld [vmem:[%s737] sm:$0x1]
    %v740 = vlaneseq
    %v741 = vshrl.u32 %v740, 7
    %v742 = vsub.s32 0, %v741
    %v743 = vrot.slane %v738, %v742
    %v761 = vunpack.c.l.b16 %v721
    %v762 = vunpack.c.l.b16 %v722
    %v763 = vunpack.c.l.b16 %v723
    %v764 = vunpack.c.l.b16 %v724
    %v765 = vunpack.c.l.b16 %v725
    %v766 = vunpack.c.l.b16 %v726
    %v767 = vunpack.c.l.b16 %v727
    %v768 = vunpack.c.l.b16 %v728
    %v769 = vunpack.c.l.b16 %v729
    %v770 = vunpack.c.l.b16 %v730
    %v771 = vunpack.c.l.b16 %v731
    %v772 = vunpack.c.l.b16 %v732
    %v773 = vunpack.c.l.b16 %v733
    %v774 = vunpack.c.l.b16 %v734
    %v775 = vunpack.c.l.b16 %v735
    %v776 = vunpack.c.l.b16 %v736
    %v777 = vpack.c.b16 %v762, %v761
    %v778 = vpack.c.b16 %v764, %v763
    %v779 = vpack.c.b16 %v766, %v765
    %v780 = vpack.c.b16 %v768, %v767
    %v781 = vpack.c.b16 %v770, %v769
    %v782 = vpack.c.b16 %v772, %v771
    %v783 = vpack.c.b16 %v774, %v773
    %v784 = vpack.c.b16 %v776, %v775
    %793 = vmatprep.subr.bf16.mxu0 0
    %794 = vmatpush1.bf16.msra.mxu0 %v777
    %795 = vmatprep.subr.bf16.mxu0 0
    %796 = vmatpush1.bf16.msra.mxu0 %v778
    %797 = vmatprep.subr.bf16.mxu0 0
    %798 = vmatpush1.bf16.msra.mxu0 %v779
    %799 = vmatprep.subr.bf16.mxu0 0
    %800 = vmatpush1.bf16.msra.mxu0 %v780
    %801 = vmatprep.subr.bf16.mxu0 0
    %802 = vmatpush1.bf16.msra.mxu0 %v781
    %803 = vmatprep.subr.bf16.mxu0 0
    %804 = vmatpush1.bf16.msra.mxu0 %v782
    %805 = vmatprep.subr.bf16.mxu0 0
    %806 = vmatpush1.bf16.msra.mxu0 %v783
    %807 = vmatprep.subr.bf16.mxu0 0
    %808 = vmatpush1.bf16.msra.mxu0 %v784
    %809 = vmatprep.subr.bf16.mxu0 0
    %810 = vmatpush1.bf16.msra.mxu0 0
    %811 = vmatprep.subr.bf16.mxu0 0
    %812 = vmatpush1.bf16.msra.mxu0 0
    %813 = vmatprep.subr.bf16.mxu0 0
    %814 = vmatpush1.bf16.msra.mxu0 0
    %815 = vmatprep.subr.bf16.mxu0 0
    %816 = vmatpush1.bf16.msra.mxu0 0
    %817 = vmatprep.subr.bf16.mxu0 0
    %818 = vmatpush1.bf16.msra.mxu0 0
    %819 = vmatprep.subr.bf16.mxu0 0
    %820 = vmatpush1.bf16.msra.mxu0 0
    %821 = vmatprep.subr.bf16.mxu0 0
    %822 = vmatpush1.bf16.msra.mxu0 0
    %823 = vmatprep.subr.bf16.mxu0 0
    %824 = vmatpush1.bf16.msra.mxu0 0
    %825 = vmatprep.mubr.bf16.mxu0 0
    %826 = vmatmul.mubr.bf16.gmra.mrb[0].mxu0 %v718
    %v827 = vpop.f32.mrb[0].mxu0
    %v828 = vadd.f32 %v743, %v827
    %v829 = vpop.f32.mrb[0].mxu0
    %v830 = vpop.f32.mrb[0].mxu0
    %v831 = vadd.f32 %v743, %v830
    %v832 = vpop.f32.mrb[0].mxu0
    %833 = vmatprep.mubr.bf16.mxu0 0
    %834 = vmatmul.mubr.bf16.gmra.mrb[0].mxu0 %v719
    %v835 = vpop.f32.mrb[0].mxu0
    %v836 = vadd.f32 %v743, %v835
    %v837 = vpop.f32.mrb[0].mxu0
    %v838 = vpop.f32.mrb[0].mxu0
    %v839 = vadd.f32 %v743, %v838
    %v840 = vpop.f32.mrb[0].mxu0
    %841 = vdwg.mxu0
    %v842 = vxor.u32 %v828, 2147483648
    %v843 = vxor.u32 %v831, 2147483648
    %v844 = vxor.u32 %v836, 2147483648
    %v845 = vxor.u32 %v839, 2147483648
    %v846 = vmul.f32 %v842, 1.442695
    %v847 = vpow.pop %v846
    %v848 = vmul.f32 %v843, 1.442695
    %v849 = vpow.pop %v848
    %v850 = vmul.f32 %v844, 1.442695
    %v851 = vpow.pop %v850
    %v852 = vmul.f32 %v845, 1.442695
    %v853 = vpow.pop %v852
    %v854 = vadd.f32 %v847, 1.0
    %v855 = vadd.f32 %v849, 1.0
    %v856 = vadd.f32 %v851, 1.0
    %v857 = vadd.f32 %v853, 1.0
    %v858 = vrcp.pop %v854
    %v859 = vmul.f32 1.0, %v858
    %v860 = vrcp.pop %v855
    %v861 = vmul.f32 1.0, %v860
    %v862 = vrcp.pop %v856
    %v863 = vmul.f32 1.0, %v862
    %v864 = vrcp.pop %v857
    %v865 = vmul.f32 1.0, %v864
    %866 = vst [vmem:[#allocation13] sm:$0xff] %v859
    %867 = vst [vmem:[#allocation13 + $0x8] sm:$0xff] %v861
    %s868 = scalar_lea.vmem [#allocation13], 16
    %869 = vst [vmem:[%s868] sm:$0xff] %v863
    %870 = vst [vmem:[%s868 + $0x8] sm:$0xff] %v865
    %871 = vst [vmem:[#allocation2] sm:$0xff] %v103
    %872 = vst [vmem:[#allocation2 + $0x8] sm:$0xff] %v104
    %873 = vst [vmem:[#allocation2 + $0x10] sm:$0xff] %v859
    %874 = vst [vmem:[#allocation2 + $0x18] sm:$0xff] %v861
    %v875 = vld [vmem:[#allocation2] sm:$0xff]
    %v876 = vld [vmem:[#allocation2 + $0x8] sm:$0xff]
    %v877 = vld [vmem:[#allocation2 + $0x10] sm:$0xff]
    %v878 = vld [vmem:[#allocation2 + $0x18] sm:$0xff]
    %v879 = vpack.c.bf16 %v876, %v875
    %v880 = vpack.c.bf16 %v878, %v877
    %v881 = vld [vmem:[#allocation11] sm:$0xf]
    %v882 = vld [vmem:[#allocation11 + $0x4] sm:$0xf]
    %v883 = vld [vmem:[#allocation11 + $0x8] sm:$0xf]
    %v884 = vld [vmem:[#allocation11 + $0xc] sm:$0xf]
    %v885 = vld [vmem:[#allocation11 + $0x10] sm:$0xf]
    %v886 = vld [vmem:[#allocation11 + $0x14] sm:$0xf]
    %v887 = vld [vmem:[#allocation11 + $0x18] sm:$0xf]
    %v888 = vld [vmem:[#allocation11 + $0x1c] sm:$0xf]
    %v889 = vld [vmem:[#allocation11 + $0x20] sm:$0xf]
    %v890 = vld [vmem:[#allocation11 + $0x24] sm:$0xf]
    %v891 = vld [vmem:[#allocation11 + $0x28] sm:$0xf]
    %v892 = vld [vmem:[#allocation11 + $0x2c] sm:$0xf]
    %v893 = vld [vmem:[#allocation11 + $0x30] sm:$0xf]
    %v894 = vld [vmem:[#allocation11 + $0x34] sm:$0xf]
    %v895 = vld [vmem:[#allocation11 + $0x38] sm:$0xf]
    %v896 = vld [vmem:[#allocation11 + $0x3c] sm:$0xf]
    %v897 = vld [vmem:[%s7] sm:$0x1]
    %v899 = vlaneseq
    %v900 = vshrl.u32 %v899, 7
    %v901 = vsub.s32 0, %v900
    %v902 = vrot.slane %v897, %v901
    %v920 = vunpack.c.l.b16 %v881
    %v921 = vunpack.c.l.b16 %v882
    %v922 = vunpack.c.l.b16 %v883
    %v923 = vunpack.c.l.b16 %v884
    %v924 = vunpack.c.l.b16 %v885
    %v925 = vunpack.c.l.b16 %v886
    %v926 = vunpack.c.l.b16 %v887
    %v927 = vunpack.c.l.b16 %v888
    %v928 = vunpack.c.l.b16 %v889
    %v929 = vunpack.c.l.b16 %v890
    %v930 = vunpack.c.l.b16 %v891
    %v931 = vunpack.c.l.b16 %v892
    %v932 = vunpack.c.l.b16 %v893
    %v933 = vunpack.c.l.b16 %v894
    %v934 = vunpack.c.l.b16 %v895
    %v935 = vunpack.c.l.b16 %v896
    %v936 = vpack.c.b16 %v921, %v920
    %v937 = vpack.c.b16 %v923, %v922
    %v938 = vpack.c.b16 %v925, %v924
    %v939 = vpack.c.b16 %v927, %v926
    %v940 = vpack.c.b16 %v929, %v928
    %v941 = vpack.c.b16 %v931, %v930
    %v942 = vpack.c.b16 %v933, %v932
    %v943 = vpack.c.b16 %v935, %v934
    %952 = vmatprep.subr.bf16.mxu0 0
    %953 = vmatpush1.bf16.msra.mxu0 %v936
    %954 = vmatprep.subr.bf16.mxu0 0
    %955 = vmatpush1.bf16.msra.mxu0 %v937
    %956 = vmatprep.subr.bf16.mxu0 0
    %957 = vmatpush1.bf16.msra.mxu0 %v938
    %958 = vmatprep.subr.bf16.mxu0 0
    %959 = vmatpush1.bf16.msra.mxu0 %v939
    %960 = vmatprep.subr.bf16.mxu0 0
    %961 = vmatpush1.bf16.msra.mxu0 %v940
    %962 = vmatprep.subr.bf16.mxu0 0
    %963 = vmatpush1.bf16.msra.mxu0 %v941
    %964 = vmatprep.subr.bf16.mxu0 0
    %965 = vmatpush1.bf16.msra.mxu0 %v942
    %966 = vmatprep.subr.bf16.mxu0 0
    %967 = vmatpush1.bf16.msra.mxu0 %v943
    %968 = vmatprep.subr.bf16.mxu0 0
    %969 = vmatpush1.bf16.msra.mxu0 0
    %970 = vmatprep.subr.bf16.mxu0 0
    %971 = vmatpush1.bf16.msra.mxu0 0
    %972 = vmatprep.subr.bf16.mxu0 0
    %973 = vmatpush1.bf16.msra.mxu0 0
    %974 = vmatprep.subr.bf16.mxu0 0
    %975 = vmatpush1.bf16.msra.mxu0 0
    %976 = vmatprep.subr.bf16.mxu0 0
    %977 = vmatpush1.bf16.msra.mxu0 0
    %978 = vmatprep.subr.bf16.mxu0 0
    %979 = vmatpush1.bf16.msra.mxu0 0
    %980 = vmatprep.subr.bf16.mxu0 0
    %981 = vmatpush1.bf16.msra.mxu0 0
    %982 = vmatprep.subr.bf16.mxu0 0
    %983 = vmatpush1.bf16.msra.mxu0 0
    %984 = vmatprep.mubr.bf16.mxu0 0
    %985 = vmatmul.mubr.bf16.gmra.mrb[0].mxu0 %v879
    %v986 = vpop.f32.mrb[0].mxu0
    %v987 = vadd.f32 %v902, %v986
    %v988 = vpop.f32.mrb[0].mxu0
    %v989 = vpop.f32.mrb[0].mxu0
    %v990 = vadd.f32 %v902, %v989
    %v991 = vpop.f32.mrb[0].mxu0
    %992 = vmatprep.mubr.bf16.mxu0 0
    %993 = vmatmul.mubr.bf16.gmra.mrb[0].mxu0 %v880
    %v994 = vpop.f32.mrb[0].mxu0
    %v995 = vadd.f32 %v902, %v994
    %v996 = vpop.f32.mrb[0].mxu0
    %v997 = vpop.f32.mrb[0].mxu0
    %v998 = vadd.f32 %v902, %v997
    %v999 = vpop.f32.mrb[0].mxu0
    %1000 = vdwg.mxu0
    %v1001 = vmax.f32 %v987, 0.0
    %v1002 = vmax.f32 %v990, 0.0
    %v1003 = vmax.f32 %v995, 0.0
    %v1004 = vmax.f32 %v998, 0.0
    %v1005 = vpack.c.bf16 %v1002, %v1001
    %v1006 = vpack.c.bf16 %v1004, %v1003
    %s1007 = scalar_lea.vmem [#allocation11], 64
    %v1008 = vld [vmem:[%s1007] sm:$0xf]
    %v1009 = vld [vmem:[%s1007 + $0x4] sm:$0xf]
    %v1010 = vld [vmem:[%s1007 + $0x8] sm:$0xf]
    %v1011 = vld [vmem:[%s1007 + $0xc] sm:$0xf]
    %v1012 = vld [vmem:[%s1007 + $0x10] sm:$0xf]
    %v1013 = vld [vmem:[%s1007 + $0x14] sm:$0xf]
    %v1014 = vld [vmem:[%s1007 + $0x18] sm:$0xf]
    %v1015 = vld [vmem:[%s1007 + $0x1c] sm:$0xf]
    %v1016 = vld [vmem:[%s1007 + $0x20] sm:$0xf]
    %v1017 = vld [vmem:[%s1007 + $0x24] sm:$0xf]
    %v1018 = vld [vmem:[%s1007 + $0x28] sm:$0xf]
    %v1019 = vld [vmem:[%s1007 + $0x2c] sm:$0xf]
    %v1020 = vld [vmem:[%s1007 + $0x30] sm:$0xf]
    %v1021 = vld [vmem:[%s1007 + $0x34] sm:$0xf]
    %v1022 = vld [vmem:[%s1007 + $0x38] sm:$0xf]
    %v1023 = vld [vmem:[%s1007 + $0x3c] sm:$0xf]
    %s1024 = scalar_lea.vmem %s7, 1
    %v1025 = vld [vmem:[%s1024] sm:$0x1]
    %v1027 = vlaneseq
    %v1028 = vshrl.u32 %v1027, 7
    %v1029 = vsub.s32 0, %v1028
    %v1030 = vrot.slane %v1025, %v1029
    %v1048 = vunpack.c.l.b16 %v1008
    %v1049 = vunpack.c.l.b16 %v1009
    %v1050 = vunpack.c.l.b16 %v1010
    %v1051 = vunpack.c.l.b16 %v1011
    %v1052 = vunpack.c.l.b16 %v1012
    %v1053 = vunpack.c.l.b16 %v1013
    %v1054 = vunpack.c.l.b16 %v1014
    %v1055 = vunpack.c.l.b16 %v1015
    %v1056 = vunpack.c.l.b16 %v1016
    %v1057 = vunpack.c.l.b16 %v1017
    %v1058 = vunpack.c.l.b16 %v1018
    %v1059 = vunpack.c.l.b16 %v1019
    %v1060 = vunpack.c.l.b16 %v1020
    %v1061 = vunpack.c.l.b16 %v1021
    %v1062 = vunpack.c.l.b16 %v1022
    %v1063 = vunpack.c.l.b16 %v1023
    %v1064 = vpack.c.b16 %v1049, %v1048
    %v1065 = vpack.c.b16 %v1051, %v1050
    %v1066 = vpack.c.b16 %v1053, %v1052
    %v1067 = vpack.c.b16 %v1055, %v1054
    %v1068 = vpack.c.b16 %v1057, %v1056
    %v1069 = vpack.c.b16 %v1059, %v1058
    %v1070 = vpack.c.b16 %v1061, %v1060
    %v1071 = vpack.c.b16 %v1063, %v1062
    %1080 = vmatprep.subr.bf16.mxu0 0
    %1081 = vmatpush1.bf16.msra.mxu0 %v1064
    %1082 = vmatprep.subr.bf16.mxu0 0
    %1083 = vmatpush1.bf16.msra.mxu0 %v1065
    %1084 = vmatprep.subr.bf16.mxu0 0
    %1085 = vmatpush1.bf16.msra.mxu0 %v1066
    %1086 = vmatprep.subr.bf16.mxu0 0
    %1087 = vmatpush1.bf16.msra.mxu0 %v1067
    %1088 = vmatprep.subr.bf16.mxu0 0
    %1089 = vmatpush1.bf16.msra.mxu0 %v1068
    %1090 = vmatprep.subr.bf16.mxu0 0
    %1091 = vmatpush1.bf16.msra.mxu0 %v1069
    %1092 = vmatprep.subr.bf16.mxu0 0
    %1093 = vmatpush1.bf16.msra.mxu0 %v1070
    %1094 = vmatprep.subr.bf16.mxu0 0
    %1095 = vmatpush1.bf16.msra.mxu0 %v1071
    %1096 = vmatprep.subr.bf16.mxu0 0
    %1097 = vmatpush1.bf16.msra.mxu0 0
    %1098 = vmatprep.subr.bf16.mxu0 0
    %1099 = vmatpush1.bf16.msra.mxu0 0
    %1100 = vmatprep.subr.bf16.mxu0 0
    %1101 = vmatpush1.bf16.msra.mxu0 0
    %1102 = vmatprep.subr.bf16.mxu0 0
    %1103 = vmatpush1.bf16.msra.mxu0 0
    %1104 = vmatprep.subr.bf16.mxu0 0
    %1105 = vmatpush1.bf16.msra.mxu0 0
    %1106 = vmatprep.subr.bf16.mxu0 0
    %1107 = vmatpush1.bf16.msra.mxu0 0
    %1108 = vmatprep.subr.bf16.mxu0 0
    %1109 = vmatpush1.bf16.msra.mxu0 0
    %1110 = vmatprep.subr.bf16.mxu0 0
    %1111 = vmatpush1.bf16.msra.mxu0 0
    %1112 = vmatprep.mubr.bf16.mxu0 0
    %1113 = vmatmul.mubr.bf16.gmra.mrb[0].mxu0 %v1005
    %v1114 = vpop.f32.mrb[0].mxu0
    %v1115 = vadd.f32 %v1030, %v1114
    %v1116 = vpop.f32.mrb[0].mxu0
    %v1117 = vpop.f32.mrb[0].mxu0
    %v1118 = vadd.f32 %v1030, %v1117
    %v1119 = vpop.f32.mrb[0].mxu0
    %1120 = vmatprep.mubr.bf16.mxu0 0
    %1121 = vmatmul.mubr.bf16.gmra.mrb[0].mxu0 %v1006
    %v1122 = vpop.f32.mrb[0].mxu0
    %v1123 = vadd.f32 %v1030, %v1122
    %v1124 = vpop.f32.mrb[0].mxu0
    %v1125 = vpop.f32.mrb[0].mxu0
    %v1126 = vadd.f32 %v1030, %v1125
    %v1127 = vpop.f32.mrb[0].mxu0
    %1128 = vdwg.mxu0
    %v1129 = vmax.f32 %v1115, 0.0
    %v1130 = vmax.f32 %v1118, 0.0
    %v1131 = vmax.f32 %v1123, 0.0
    %v1132 = vmax.f32 %v1126, 0.0
    %v1133 = vpack.c.bf16 %v1130, %v1129
    %v1134 = vpack.c.bf16 %v1132, %v1131
    %s1135 = scalar_lea.vmem [#allocation11], 128
    %v1136 = vld [vmem:[%s1135] sm:$0xf]
    %v1137 = vld [vmem:[%s1135 + $0x4] sm:$0xf]
    %v1138 = vld [vmem:[%s1135 + $0x8] sm:$0xf]
    %v1139 = vld [vmem:[%s1135 + $0xc] sm:$0xf]
    %v1140 = vld [vmem:[%s1135 + $0x10] sm:$0xf]
    %v1141 = vld [vmem:[%s1135 + $0x14] sm:$0xf]
    %v1142 = vld [vmem:[%s1135 + $0x18] sm:$0xf]
    %v1143 = vld [vmem:[%s1135 + $0x1c] sm:$0xf]
    %v1144 = vld [vmem:[%s1135 + $0x20] sm:$0xf]
    %v1145 = vld [vmem:[%s1135 + $0x24] sm:$0xf]
    %v1146 = vld [vmem:[%s1135 + $0x28] sm:$0xf]
    %v1147 = vld [vmem:[%s1135 + $0x2c] sm:$0xf]
    %v1148 = vld [vmem:[%s1135 + $0x30] sm:$0xf]
    %v1149 = vld [vmem:[%s1135 + $0x34] sm:$0xf]
    %v1150 = vld [vmem:[%s1135 + $0x38] sm:$0xf]
    %v1151 = vld [vmem:[%s1135 + $0x3c] sm:$0xf]
    %s1152 = scalar_lea.vmem %s7, 2
    %v1153 = vld [vmem:[%s1152] sm:$0x1]
    %v1155 = vlaneseq
    %v1156 = vshrl.u32 %v1155, 7
    %v1157 = vsub.s32 0, %v1156
    %v1158 = vrot.slane %v1153, %v1157
    %v1176 = vunpack.c.l.b16 %v1136
    %v1177 = vunpack.c.l.b16 %v1137
    %v1178 = vunpack.c.l.b16 %v1138
    %v1179 = vunpack.c.l.b16 %v1139
    %v1180 = vunpack.c.l.b16 %v1140
    %v1181 = vunpack.c.l.b16 %v1141
    %v1182 = vunpack.c.l.b16 %v1142
    %v1183 = vunpack.c.l.b16 %v1143
    %v1184 = vunpack.c.l.b16 %v1144
    %v1185 = vunpack.c.l.b16 %v1145
    %v1186 = vunpack.c.l.b16 %v1146
    %v1187 = vunpack.c.l.b16 %v1147
    %v1188 = vunpack.c.l.b16 %v1148
    %v1189 = vunpack.c.l.b16 %v1149
    %v1190 = vunpack.c.l.b16 %v1150
    %v1191 = vunpack.c.l.b16 %v1151
    %v1192 = vpack.c.b16 %v1177, %v1176
    %v1193 = vpack.c.b16 %v1179, %v1178
    %v1194 = vpack.c.b16 %v1181, %v1180
    %v1195 = vpack.c.b16 %v1183, %v1182
    %v1196 = vpack.c.b16 %v1185, %v1184
    %v1197 = vpack.c.b16 %v1187, %v1186
    %v1198 = vpack.c.b16 %v1189, %v1188
    %v1199 = vpack.c.b16 %v1191, %v1190
    %1208 = vmatprep.subr.bf16.mxu0 0
    %1209 = vmatpush1.bf16.msra.mxu0 %v1192
    %1210 = vmatprep.subr.bf16.mxu0 0
    %1211 = vmatpush1.bf16.msra.mxu0 %v1193
    %1212 = vmatprep.subr.bf16.mxu0 0
    %1213 = vmatpush1.bf16.msra.mxu0 %v1194
    %1214 = vmatprep.subr.bf16.mxu0 0
    %1215 = vmatpush1.bf16.msra.mxu0 %v1195
    %1216 = vmatprep.subr.bf16.mxu0 0
    %1217 = vmatpush1.bf16.msra.mxu0 %v1196
    %1218 = vmatprep.subr.bf16.mxu0 0
    %1219 = vmatpush1.bf16.msra.mxu0 %v1197
    %1220 = vmatprep.subr.bf16.mxu0 0
    %1221 = vmatpush1.bf16.msra.mxu0 %v1198
    %1222 = vmatprep.subr.bf16.mxu0 0
    %1223 = vmatpush1.bf16.msra.mxu0 %v1199
    %1224 = vmatprep.subr.bf16.mxu0 0
    %1225 = vmatpush1.bf16.msra.mxu0 0
    %1226 = vmatprep.subr.bf16.mxu0 0
    %1227 = vmatpush1.bf16.msra.mxu0 0
    %1228 = vmatprep.subr.bf16.mxu0 0
    %1229 = vmatpush1.bf16.msra.mxu0 0
    %1230 = vmatprep.subr.bf16.mxu0 0
    %1231 = vmatpush1.bf16.msra.mxu0 0
    %1232 = vmatprep.subr.bf16.mxu0 0
    %1233 = vmatpush1.bf16.msra.mxu0 0
    %1234 = vmatprep.subr.bf16.mxu0 0
    %1235 = vmatpush1.bf16.msra.mxu0 0
    %1236 = vmatprep.subr.bf16.mxu0 0
    %1237 = vmatpush1.bf16.msra.mxu0 0
    %1238 = vmatprep.subr.bf16.mxu0 0
    %1239 = vmatpush1.bf16.msra.mxu0 0
    %1240 = vmatprep.mubr.bf16.mxu0 0
    %1241 = vmatmul.mubr.bf16.gmra.mrb[0].mxu0 %v1133
    %v1242 = vpop.f32.mrb[0].mxu0
    %v1243 = vadd.f32 %v1158, %v1242
    %v1244 = vpop.f32.mrb[0].mxu0
    %v1245 = vpop.f32.mrb[0].mxu0
    %v1246 = vadd.f32 %v1158, %v1245
    %v1247 = vpop.f32.mrb[0].mxu0
    %1248 = vmatprep.mubr.bf16.mxu0 0
    %1249 = vmatmul.mubr.bf16.gmra.mrb[0].mxu0 %v1134
    %v1250 = vpop.f32.mrb[0].mxu0
    %v1251 = vadd.f32 %v1158, %v1250
    %v1252 = vpop.f32.mrb[0].mxu0
    %v1253 = vpop.f32.mrb[0].mxu0
    %v1254 = vadd.f32 %v1158, %v1253
    %v1255 = vpop.f32.mrb[0].mxu0
    %1256 = vdwg.mxu0
    %v1257 = vxor.u32 %v1243, 2147483648
    %v1258 = vxor.u32 %v1246, 2147483648
    %v1259 = vxor.u32 %v1251, 2147483648
    %v1260 = vxor.u32 %v1254, 2147483648
    %v1261 = vmul.f32 %v1257, 1.442695
    %v1262 = vpow.pop %v1261
    %v1263 = vmul.f32 %v1258, 1.442695
    %v1264 = vpow.pop %v1263
    %v1265 = vmul.f32 %v1259, 1.442695
    %v1266 = vpow.pop %v1265
    %v1267 = vmul.f32 %v1260, 1.442695
    %v1268 = vpow.pop %v1267
    %v1269 = vadd.f32 %v1262, 1.0
    %v1270 = vadd.f32 %v1264, 1.0
    %v1271 = vadd.f32 %v1266, 1.0
    %v1272 = vadd.f32 %v1268, 1.0
    %v1273 = vrcp.pop %v1269
    %v1274 = vmul.f32 1.0, %v1273
    %v1275 = vrcp.pop %v1270
    %v1276 = vmul.f32 1.0, %v1275
    %v1277 = vrcp.pop %v1271
    %v1278 = vmul.f32 1.0, %v1277
    %v1279 = vrcp.pop %v1272
    %v1280 = vmul.f32 1.0, %v1279
    %1281 = vst [vmem:[#allocation15] sm:$0xff] %v1274
    %1282 = vst [vmem:[#allocation15 + $0x8] sm:$0xff] %v1276
    %s1283 = scalar_lea.vmem [#allocation15], 16
    %1284 = vst [vmem:[%s1283] sm:$0xff] %v1278
    %1285 = vst [vmem:[%s1283 + $0x8] sm:$0xff] %v1280
    // Predicated region
    $region54: #{tpu_custom_call.1} parent=1 // pred_check
      _
    $region55: #{tpu_custom_call.1} parent=1 // pred_check_branch
      %1287 = sbr.rel (0) target = $region57
    $region56: #{tpu_custom_call.1} parent=1 // pred_region
      %s1289 = ssub.s32 256, 256
      %1290 = vsyncadd [#allocation5], %s1289
      %s1291 = sshll.u32 [#allocation12], 4
      %s1292 = int_to_ptr.vmem [resolvable:$true] %s1291
      %1297 = dma.vmem_to_hbm [thread:$0]  %s1292, 256, %s8, [#allocation5], 128, 128, 8
    $region57: #{tpu_custom_call.1} parent=1 // pred_fallthru
      _
    // Predicated region
    $region58: #{tpu_custom_call.1} parent=1 // pred_check
      _
    $region59: #{tpu_custom_call.1} parent=1 // pred_check_branch
      %1299 = sbr.rel (0) target = $region61
    $region60: #{tpu_custom_call.1} parent=1 // pred_region
      %s1301 = ssub.s32 512, 512
      %1302 = vsyncadd [#allocation14], %s1301
      %s1303 = sshll.u32 [#allocation13], 4
      %s1304 = int_to_ptr.vmem [resolvable:$true] %s1303
      %1309 = dma.vmem_to_hbm [thread:$0]  %s1304, 512, %s9, [#allocation14], 128, 128, 8
    $region61: #{tpu_custom_call.1} parent=1 // pred_fallthru
      _
    // Predicated region
    $region62: #{tpu_custom_call.1} parent=1 // pred_check
      _
    $region63: #{tpu_custom_call.1} parent=1 // pred_check_branch
      %1311 = sbr.rel (0) target = $region65
    $region64: #{tpu_custom_call.1} parent=1 // pred_region
      %s1313 = ssub.s32 512, 512
      %1314 = vsyncadd [#allocation14], %s1313
      %s1315 = sshll.u32 [#allocation15], 4
      %s1316 = int_to_ptr.vmem [resolvable:$true] %s1315
      %1321 = dma.vmem_to_hbm [thread:$0]  %s1316, 512, %s10, [#allocation14], 128, 128, 8
    $region65: #{tpu_custom_call.1} parent=1 // pred_fallthru
      _
    // Predicated region
    $region66: #{tpu_custom_call.1} parent=1 // pred_check
      _
    $region67: #{tpu_custom_call.1} parent=1 // pred_check_branch
      %1323 = sbr.rel (0) target = $region69
    $region68: #{tpu_custom_call.1} parent=1 // pred_region
      %1324 = dma.done [#allocation5], 256
    $region69: #{tpu_custom_call.1} parent=1 // pred_fallthru
      _
    // Predicated region
    $region70: #{tpu_custom_call.1} parent=1 // pred_check
      _
    $region71: #{tpu_custom_call.1} parent=1 // pred_check_branch
      %1326 = sbr.rel (0) target = $region73
    $region72: #{tpu_custom_call.1} parent=1 // pred_region
      %1327 = dma.done [#allocation14], 512
    $region73: #{tpu_custom_call.1} parent=1 // pred_fallthru
      _
    // Predicated region
    $region74: #{tpu_custom_call.1} parent=1 // pred_check
      _
    $region75: #{tpu_custom_call.1} parent=1 // pred_check_branch
      %1329 = sbr.rel (0) target = $region77
    $region76: #{tpu_custom_call.1} parent=1 // pred_region
      %1330 = dma.done [#allocation14], 512
    $region77: #{tpu_custom_call.1} parent=1 // pred_fallthru
      _
    %1331 = vsyncpa [#allocation4], 1
    %1332 = vsyncpa [#allocation7], 1
    %1333 = vsyncpa [#allocation10], 1
    %1334 = vsyncpa [#allocation5], 1
    %1335 = vsyncpa [#allocation14], 1

</llo_original>
